<compile_context>
chip_gen: v5e
topology: v5e:2x2
jax: 0.10.0
libtpu: 0.0.40
codegen_flags: <defaults>
</compile_context>

<pallas_src>
import functools

import jax
import jax.numpy as jnp
from jax.experimental import pallas as pl
from jax.experimental.pallas import tpu as pltpu


def _round_up(x: int, m: int) -> int:
    return ((x + m - 1) // m) * m


def _cdiv(a: int, b: int) -> int:
    return -(-a // b)


def _mlp_kernel(x_ref, w1_ref, b1_ref, w2_ref, b2_ref, w3_ref, b3_ref, o_ref):
    # Layer 1: (TB, 3072) @ (3072, H) + (1, H), ReLU.  bf16 MXU, f32 accumulate.
    h1 = jnp.dot(x_ref[...], w1_ref[...], preferred_element_type=jnp.float32)
    h1 = jnp.maximum(h1 + b1_ref[...], 0.0)
    # Layer 2: (TB, H) @ (H, H/2) + (1, H/2), ReLU.
    h2 = jnp.dot(h1.astype(jnp.bfloat16), w2_ref[...],
                 preferred_element_type=jnp.float32)
    h2 = jnp.maximum(h2 + b2_ref[...], 0.0)
    # Layer 3: (TB, H/2) @ (H/2, 128-padded) + (1, 128-padded); bf16 store.
    out = jnp.dot(h2.astype(jnp.bfloat16), w3_ref[...],
                  preferred_element_type=jnp.float32)
    o_ref[...] = (out + b3_ref[...]).astype(o_ref.dtype)


def _vmem_capacity_bytes() -> int:
    try:
        return int(pltpu.get_tpu_info().vmem_capacity_bytes)
    except Exception:
        return 64 << 20  # conservative fallback: v7x per-TensorCore VMEM


def _vmem_limit_bytes(tile_b, in_dim, hidden, half, n_out_p):
    # Weights/biases are resident (constant index_map) but still double-buffered.
    w_bytes = 2 * (in_dim * hidden + hidden * half + half * n_out_p) * 2   # bf16
    b_bytes = 2 * (hidden + half + n_out_p) * 4                            # f32
    x_bytes = 2 * tile_b * in_dim * 2        # bf16 x tile, double-buffered
    out_bytes = 2 * tile_b * n_out_p * 2     # bf16 out tile, double-buffered
    act_bytes = tile_b * (hidden + half) * 4 # f32 in-kernel temporaries (h1, h2)
    est = int((w_bytes + b_bytes + x_bytes + out_bytes + act_bytes) * 1.25) + (4 << 20)
    # Generation-aware cap: ~96 MiB on v5e/v6e (128 MiB physical), ~48 MiB on v7x (64 MiB).
    cap = int(0.75 * _vmem_capacity_bytes())
    return min(max(est, 16 << 20), cap)


def _pick_tile_b(requested: int, B: int) -> int:
    """Batch tile: big enough to amortize per-step overhead, small enough to keep
    >=2 (ideally >=4) grid steps so DMA/compute overlap and v7x's two TCs both
    get work; >=128 rows where possible for full MXU M occupancy; 16-aligned for
    bf16 sublane packing."""
    tb = min(requested, _round_up(B, 16))
    if B >= 4 * 128:
        tb = min(tb, max(128, _round_up(_cdiv(B, 4), 16)))
    elif B >= 2 * 128:
        tb = min(tb, max(128, _round_up(_cdiv(B, 2), 16)))
    return max(16, _round_up(tb, 16))


@functools.partial(jax.jit, static_argnames=("tile_b",))
def mlp_net_forward(x_nchw, w1_t, b1, w2_t, b2, w3_t, b3, *, tile_b=1024):
    """x_nchw: (B, 3, 32, 32), ideally bf16 (producer-fused cast). Returns (B, 10) f32 logits.

    Weights are stored transposed (in, out) relative to torch's nn.Linear (out, in).
    Biases may be (N,) or (1, N)."""
    B = x_nchw.shape[0]
    in_dim = x_nchw.shape[1] * x_nchw.shape[2] * x_nchw.shape[3]
    x_flat = x_nchw.reshape(B, in_dim)  # torch.flatten(x, 1): C,H,W order preserved
    if x_flat.dtype != jnp.bfloat16:
        # Fallback cast. For peak perf the *producer* should emit bf16 (fused),
        # so this extra HBM pass never runs.
        x_flat = x_flat.astype(jnp.bfloat16)

    hidden = w1_t.shape[1]
    half = w2_t.shape[1]
    n_out = w3_t.shape[1]
    n_out_p = _round_up(max(n_out, 128), 128)  # lane-dense output (pad 10 -> 128)

    # Normalize bias shapes to (1, N) f32 (accept torch-style 1-D biases).
    b1 = jnp.reshape(b1, (1, hidden)).astype(jnp.float32)
    b2 = jnp.reshape(b2, (1, half)).astype(jnp.float32)
    b3 = jnp.reshape(b3, (1, n_out)).astype(jnp.float32)

    # Batch tiling.
    tile_b = _pick_tile_b(tile_b, B)
    B_pad = _round_up(B, tile_b)
    if B_pad != B:
        # Only the ragged tail tile is padded; aligned batches pay nothing extra.
        x_flat = jnp.pad(x_flat, ((0, B_pad - B), (0, 0)))
    n_blocks = B_pad // tile_b

    # Pre-cast weights to bf16 (f32 accumulation happens in the kernel).
    # Zero-pad layer-3 weight AND bias to the padded lane width so padded output
    # columns are exactly zero.
    w1_b = w1_t.astype(jnp.bfloat16)
    w2_b = w2_t.astype(jnp.bfloat16)
    w3_b = jnp.pad(w3_t, ((0, 0), (0, n_out_p - n_out))).astype(jnp.bfloat16)
    b3_p = jnp.pad(b3, ((0, 0), (0, n_out_p - n_out)))

    # Weights/biases stay resident in VMEM across grid steps (constant index_map).
    resident = lambda shape: pl.BlockSpec(shape, lambda i: (0,) * len(shape))

    flops = 2 * B_pad * (in_dim * hidden + hidden * half + half * n_out_p)
    bytes_accessed = (B_pad * in_dim * 2                                   # bf16 x in
                      + (in_dim * hidden + hidden * half + half * n_out_p) * 2
                      + (hidden + half + n_out_p) * 4                      # weights + biases
                      + B_pad * n_out_p * 2)                               # bf16 out

    out_p = pl.pallas_call(
        _mlp_kernel,
        out_shape=jax.ShapeDtypeStruct((B_pad, n_out_p), jnp.bfloat16),
        grid=(n_blocks,),
        in_specs=[
            pl.BlockSpec((tile_b, in_dim), lambda i: (i, 0)),  # streamed bf16 x tile
            resident((in_dim, hidden)),
            resident((1, hidden)),
            resident((hidden, half)),
            resident((1, half)),
            resident((half, n_out_p)),
            resident((1, n_out_p)),
        ],
        out_specs=pl.BlockSpec((tile_b, n_out_p), lambda i: (i, 0)),
        compiler_params=pltpu.CompilerParams(
            # Batch axis is embarrassingly parallel -> megacore sharding on v7x
            # (no-op on single-TC v5e/v6e).
            dimension_semantics=("parallel",),
            vmem_limit_bytes=_vmem_limit_bytes(tile_b, in_dim, hidden, half, n_out_p),
        ),
        cost_estimate=pl.CostEstimate(
            flops=flops, transcendentals=0, bytes_accessed=bytes_accessed),
    )(x_flat, w1_b, b1, w2_b, b2, w3_b, b3_p)

    # Tiny slice + upcast; fused by XLA (the padded bf16 slab never round-trips twice).
    return out_p[:B, :n_out].astype(jnp.float32)


def init_params(key, in_dim=3 * 32 * 32, hidden_dim=256):
    """Deterministic synthetic params matching nn.Linear shapes.
    Weights stored transposed (in, out); biases 1-D (N,) like torch."""
    half = hidden_dim // 2
    ks = jax.random.split(key, 6)

    def linear(kw, kb, fan_in, fan_out):
        bound = 1.0 / jnp.sqrt(float(fan_in))
        w_t = jax.random.uniform(kw, (fan_in, fan_out), jnp.float32, -bound, bound)
        b = jax.random.uniform(kb, (fan_out,), jnp.float32, -bound, bound)
        return w_t, b

    w1_t, b1 = linear(ks[0], ks[1], in_dim, hidden_dim)
    w2_t, b2 = linear(ks[2], ks[3], hidden_dim, half)
    w3_t, b3 = linear(ks[4], ks[5], half, 10)
    return (w1_t, b1, w2_t, b2, w3_t, b3)


def _reference_bf16(x_nchw, params):
    """Mirrors kernel math: bf16 MXU inputs, f32 accumulation, bf16 output store."""
    w1_t, b1, w2_t, b2, w3_t, b3 = params
    bf = jnp.bfloat16
    x = x_nchw.reshape(x_nchw.shape[0], -1).astype(bf)
    h = jnp.dot(x, w1_t.astype(bf), preferred_element_type=jnp.float32) + b1.reshape(1, -1)
    h = jnp.maximum(h, 0.0)
    h = jnp.dot(h.astype(bf), w2_t.astype(bf), preferred_element_type=jnp.float32) + b2.reshape(1, -1)
    h = jnp.maximum(h, 0.0)
    o = jnp.dot(h.astype(bf), w3_t.astype(bf), preferred_element_type=jnp.float32) + b3.reshape(1, -1)
    return o.astype(bf).astype(jnp.float32)


def _reference_f32(x_nchw, params):
    w1_t, b1, w2_t, b2, w3_t, b3 = params
    x = x_nchw.reshape(x_nchw.shape[0], -1).astype(jnp.float32)
    h = jnp.maximum(x @ w1_t + b1.reshape(1, -1), 0.0)
    h = jnp.maximum(h @ w2_t + b2.reshape(1, -1), 0.0)
    return h @ w3_t + b3.reshape(1, -1)


if __name__ == "__main__":
    key = jax.random.PRNGKey(0)
    k_x, k_p = jax.random.split(key)

    # Small shapes: batch=2, CIFAR-shaped input (3, 32, 32), hidden_dim=256
    # (module default is 4096; 256 keeps the demo small).
    B, C, H, W = 2, 3, 32, 32
    hidden_dim = 256
    # Producer emits bf16 (halves the dominant x HBM stream into the kernel).
    x = jax.random.normal(k_x, (B, C, H, W), jnp.float32).astype(jnp.bfloat16)
    params = init_params(k_p, in_dim=C * H * W, hidden_dim=hidden_dim)

    out = mlp_net_forward(x, *params)
    out = jax.block_until_ready(out)
    assert out.shape == (B, 10), out.shape

    ref_bf16 = _reference_bf16(x, params)
    assert jnp.allclose(out, ref_bf16, atol=2e-2, rtol=2e-2), "mismatch vs bf16 reference"

    ref_f32 = _reference_f32(x, params)
    assert jnp.allclose(out, ref_f32, atol=8e-2, rtol=8e-2), "mismatch vs f32 reference"

    print("KERNEL_OK")
</pallas_src>

<mosaic_0001>
module attributes {stable_mosaic.version = 11 : i64} {
  func.func @_mlp_kernel(%arg0: i32, %arg1: memref<16x3072xbf16, #tpu.memory_space<vmem>>, %arg2: memref<3072x256xbf16, #tpu.memory_space<vmem>>, %arg3: memref<1x256xf32, #tpu.memory_space<vmem>>, %arg4: memref<256x128xbf16, #tpu.memory_space<vmem>>, %arg5: memref<1x128xf32, #tpu.memory_space<vmem>>, %arg6: memref<128x128xbf16, #tpu.memory_space<vmem>>, %arg7: memref<1x128xf32, #tpu.memory_space<vmem>>, %arg8: memref<16x128xbf16, #tpu.memory_space<vmem>>) attributes {dimension_semantics = [#tpu.dimension_semantics<parallel>], iteration_bounds = array<i64: 1>, scalar_prefetch = 0 : i64, scratch_operands = 0 : i64, tpu.core_type = #tpu.core_type<tc>, window_params = [{transform_indices = @transform_0, window_bounds = array<i64: 16, 3072>}, {pipeline_mode = #tpu.pipeline_mode<synchronous>, transform_indices = @transform_1, window_bounds = array<i64: 3072, 256>}, {pipeline_mode = #tpu.pipeline_mode<synchronous>, transform_indices = @transform_2, window_bounds = array<i64: 1, 256>}, {pipeline_mode = #tpu.pipeline_mode<synchronous>, transform_indices = @transform_3, window_bounds = array<i64: 256, 128>}, {pipeline_mode = #tpu.pipeline_mode<synchronous>, transform_indices = @transform_4, window_bounds = array<i64: 1, 128>}, {pipeline_mode = #tpu.pipeline_mode<synchronous>, transform_indices = @transform_5, window_bounds = array<i64: 128, 128>}, {pipeline_mode = #tpu.pipeline_mode<synchronous>, transform_indices = @transform_6, window_bounds = array<i64: 1, 128>}, {transform_indices = @transform_7, window_bounds = array<i64: 16, 128>}]} {
    %c0 = arith.constant 0 : index
    %c0_0 = arith.constant 0 : index
    %0 = vector.load %arg1[%c0, %c0_0] : memref<16x3072xbf16, #tpu.memory_space<vmem>>, vector<16x3072xbf16>
    %c0_1 = arith.constant 0 : index
    %c0_2 = arith.constant 0 : index
    %1 = vector.load %arg2[%c0_1, %c0_2] : memref<3072x256xbf16, #tpu.memory_space<vmem>>, vector<3072x256xbf16>
    %cst = arith.constant dense<0.000000e+00> : vector<16x256xf32>
    %2 = tpu.matmul %0, %1, %cst {dimension_numbers = #tpu.dot_dimension_numbers<[1], [0], [0], [1], [0, 0, 1, 1], [], []>} : vector<16x3072xbf16>, vector<3072x256xbf16>, vector<16x256xf32> -> vector<16x256xf32>
    %c0_3 = arith.constant 0 : index
    %c0_4 = arith.constant 0 : index
    %3 = vector.load %arg3[%c0_3, %c0_4] : memref<1x256xf32, #tpu.memory_space<vmem>>, vector<1x256xf32>
    %4 = vector.broadcast %3 : vector<1x256xf32> to vector<16x256xf32>
    %5 = arith.addf %2, %4 : vector<16x256xf32>
    %cst_5 = arith.constant 0.000000e+00 : f32
    %6 = vector.broadcast %cst_5 : f32 to vector<16x256xf32>
    %7 = arith.maximumf %5, %6 : vector<16x256xf32>
    %8 = arith.truncf %7 : vector<16x256xf32> to vector<16x256xbf16>
    %c0_6 = arith.constant 0 : index
    %c0_7 = arith.constant 0 : index
    %9 = vector.load %arg4[%c0_6, %c0_7] : memref<256x128xbf16, #tpu.memory_space<vmem>>, vector<256x128xbf16>
    %cst_8 = arith.constant dense<0.000000e+00> : vector<16x128xf32>
    %10 = tpu.matmul %8, %9, %cst_8 {dimension_numbers = #tpu.dot_dimension_numbers<[1], [0], [0], [1], [0, 0, 1, 1], [], []>} : vector<16x256xbf16>, vector<256x128xbf16>, vector<16x128xf32> -> vector<16x128xf32>
    %c0_9 = arith.constant 0 : index
    %c0_10 = arith.constant 0 : index
    %11 = vector.load %arg5[%c0_9, %c0_10] : memref<1x128xf32, #tpu.memory_space<vmem>>, vector<1x128xf32>
    %12 = vector.broadcast %11 : vector<1x128xf32> to vector<16x128xf32>
    %13 = arith.addf %10, %12 : vector<16x128xf32>
    %cst_11 = arith.constant 0.000000e+00 : f32
    %14 = vector.broadcast %cst_11 : f32 to vector<16x128xf32>
    %15 = arith.maximumf %13, %14 : vector<16x128xf32>
    %16 = arith.truncf %15 : vector<16x128xf32> to vector<16x128xbf16>
    %c0_12 = arith.constant 0 : index
    %c0_13 = arith.constant 0 : index
    %17 = vector.load %arg6[%c0_12, %c0_13] : memref<128x128xbf16, #tpu.memory_space<vmem>>, vector<128x128xbf16>
    %cst_14 = arith.constant dense<0.000000e+00> : vector<16x128xf32>
    %18 = tpu.matmul %16, %17, %cst_14 {dimension_numbers = #tpu.dot_dimension_numbers<[1], [0], [0], [1], [0, 0, 1, 1], [], []>} : vector<16x128xbf16>, vector<128x128xbf16>, vector<16x128xf32> -> vector<16x128xf32>
    %c0_15 = arith.constant 0 : index
    %c0_16 = arith.constant 0 : index
    %19 = vector.load %arg7[%c0_15, %c0_16] : memref<1x128xf32, #tpu.memory_space<vmem>>, vector<1x128xf32>
    %20 = vector.broadcast %19 : vector<1x128xf32> to vector<16x128xf32>
    %21 = arith.addf %18, %20 : vector<16x128xf32>
    %22 = arith.truncf %21 : vector<16x128xf32> to vector<16x128xbf16>
    %c0_17 = arith.constant 0 : index
    %c0_18 = arith.constant 0 : index
    %23 = vector.load %arg8[%c0_17, %c0_18] : memref<16x128xbf16, #tpu.memory_space<vmem>>, vector<16x128xbf16>
    tpu.vector_store %arg8[%c0_17, %c0_18], %22 {strides = array<i32>} : memref<16x128xbf16, #tpu.memory_space<vmem>>, vector<16x128xbf16>,
    return
  }
  func.func @transform_0(%arg0: i32) -> (i32, i32) {
    %c0_i32 = arith.constant 0 : i32
    %c0_i32_0 = arith.constant 0 : i32
    return %arg0, %c0_i32 : i32, i32
  }
  func.func @transform_1(%arg0: i32) -> (i32, i32) {
    %c0_i32 = arith.constant 0 : i32
    %c0_i32_0 = arith.constant 0 : i32
    %c0_i32_1 = arith.constant 0 : i32
    return %c0_i32, %c0_i32_0 : i32, i32
  }
  func.func @transform_2(%arg0: i32) -> (i32, i32) {
    %c0_i32 = arith.constant 0 : i32
    %c0_i32_0 = arith.constant 0 : i32
    %c0_i32_1 = arith.constant 0 : i32
    return %c0_i32, %c0_i32_0 : i32, i32
  }
  func.func @transform_3(%arg0: i32) -> (i32, i32) {
    %c0_i32 = arith.constant 0 : i32
    %c0_i32_0 = arith.constant 0 : i32
    %c0_i32_1 = arith.constant 0 : i32
    return %c0_i32, %c0_i32_0 : i32, i32
  }
  func.func @transform_4(%arg0: i32) -> (i32, i32) {
    %c0_i32 = arith.constant 0 : i32
    %c0_i32_0 = arith.constant 0 : i32
    %c0_i32_1 = arith.constant 0 : i32
    return %c0_i32, %c0_i32_0 : i32, i32
  }
  func.func @transform_5(%arg0: i32) -> (i32, i32) {
    %c0_i32 = arith.constant 0 : i32
    %c0_i32_0 = arith.constant 0 : i32
    %c0_i32_1 = arith.constant 0 : i32
    return %c0_i32, %c0_i32_0 : i32, i32
  }
  func.func @transform_6(%arg0: i32) -> (i32, i32) {
    %c0_i32 = arith.constant 0 : i32
    %c0_i32_0 = arith.constant 0 : i32
    %c0_i32_1 = arith.constant 0 : i32
    return %c0_i32, %c0_i32_0 : i32, i32
  }
  func.func @transform_7(%arg0: i32) -> (i32, i32) {
    %c0_i32 = arith.constant 0 : i32
    %c0_i32_0 = arith.constant 0 : i32
    return %arg0, %c0_i32 : i32, i32
  }
}

</mosaic_0001>

<llo_original>
// kernel: mlp_net_forward.1
$region0: #{mlp_net_forward.1}
  #allocation0 [shape = 'u32[]', space=smem, size = 0x4, offset = 0x4, fixed_abs, tag = 'smem constant byte address 0x4 - core index']
  #allocation1 [shape = 'u32[72,128]{1,0:T(1,128)}', space=vmem, size = 0x9000, scoped, tag = 'internal scratch']
  %s0 = inlined_call_operand.vmem [shape: bf16[16,3072], index: 0, kind: input, shape index: {}]
  %s1 = inlined_call_operand.vmem [shape: bf16[3072,256], index: 1, kind: input, shape index: {}]
  %s2 = inlined_call_operand.vmem [shape: f32[1,256], index: 2, kind: input, shape index: {}]
  %s3 = inlined_call_operand.vmem [shape: bf16[256,128], index: 3, kind: input, shape index: {}]
  %s4 = inlined_call_operand.vmem [shape: f32[1,128], index: 4, kind: input, shape index: {}]
  %s5 = inlined_call_operand.vmem [shape: bf16[128,128], index: 5, kind: input, shape index: {}]
  %s6 = inlined_call_operand.vmem [shape: f32[1,128], index: 6, kind: input, shape index: {}]
  %s7 = inlined_call_operand.vmem [shape: bf16[16,128], index: 7, kind: output, shape index: {}]
  %s8 = sld [smem:[#allocation0]]
  $region38: #{mlp_net_forward.1} parent=0
    _
  %s10 = ssub.s32 1, %s8
  %s11 = scalar_select 0, %s10, %s8
  // Predicated region
  $region2: #{mlp_net_forward.1} parent=0 // pred_check
    _
  $region3: #{mlp_net_forward.1} parent=0 // pred_check_branch
    %13 = sbr.rel (0) target = $region5
  $region4: #{mlp_net_forward.1} parent=0 // pred_region
    _
  $region5: #{mlp_net_forward.1} parent=0 // pred_fallthru
    _
  // Predicated region
  $region6: #{mlp_net_forward.1} parent=0 // pred_check
    _
  $region7: #{mlp_net_forward.1} parent=0 // pred_check_branch
    %15 = sbr.rel (0) target = $region9
  $region8: #{mlp_net_forward.1} parent=0 // pred_region
    _
  $region9: #{mlp_net_forward.1} parent=0 // pred_fallthru
    _
  // Predicated region
  $region10: #{mlp_net_forward.1} parent=0 // pred_check
    _
  $region11: #{mlp_net_forward.1} parent=0 // pred_check_branch
    %17 = sbr.rel (0) target = $region13
  $region12: #{mlp_net_forward.1} parent=0 // pred_region
    _
  $region13: #{mlp_net_forward.1} parent=0 // pred_fallthru
    _
  // Predicated region
  $region14: #{mlp_net_forward.1} parent=0 // pred_check
    _
  $region15: #{mlp_net_forward.1} parent=0 // pred_check_branch
    %19 = sbr.rel (0) target = $region17
  $region16: #{mlp_net_forward.1} parent=0 // pred_region
    _
  $region17: #{mlp_net_forward.1} parent=0 // pred_fallthru
    _
  // Predicated region
  $region18: #{mlp_net_forward.1} parent=0 // pred_check
    _
  $region19: #{mlp_net_forward.1} parent=0 // pred_check_branch
    %21 = sbr.rel (0) target = $region21
  $region20: #{mlp_net_forward.1} parent=0 // pred_region
    _
  $region21: #{mlp_net_forward.1} parent=0 // pred_fallthru
    _
  // Predicated region
  $region22: #{mlp_net_forward.1} parent=0 // pred_check
    _
  $region23: #{mlp_net_forward.1} parent=0 // pred_check_branch
    %23 = sbr.rel (0) target = $region25
  $region24: #{mlp_net_forward.1} parent=0 // pred_region
    _
  $region25: #{mlp_net_forward.1} parent=0 // pred_fallthru
    _
  // Predicated region
  $region26: #{mlp_net_forward.1} parent=0 // pred_check
    _
  $region27: #{mlp_net_forward.1} parent=0 // pred_check_branch
    %25 = sbr.rel (0) target = $region29
  $region28: #{mlp_net_forward.1} parent=0 // pred_region
    _
  $region29: #{mlp_net_forward.1} parent=0 // pred_fallthru
    _
  %v26 = vld [vmem:[%s0] sm:$0xff]
  %v27 = vld [vmem:[%s0 + $0x8] sm:$0xff]
  %v28 = vld [vmem:[%s0 + $0x10] sm:$0xff]
  %v29 = vld [vmem:[%s0 + $0x18] sm:$0xff]
  %v30 = vld [vmem:[%s0 + $0x20] sm:$0xff]
  %v31 = vld [vmem:[%s0 + $0x28] sm:$0xff]
  %v32 = vld [vmem:[%s0 + $0x30] sm:$0xff]
  %v33 = vld [vmem:[%s0 + $0x38] sm:$0xff]
  %v34 = vld [vmem:[%s0 + $0x40] sm:$0xff]
  %v35 = vld [vmem:[%s0 + $0x48] sm:$0xff]
  %v36 = vld [vmem:[%s0 + $0x50] sm:$0xff]
  %v37 = vld [vmem:[%s0 + $0x58] sm:$0xff]
  %v38 = vld [vmem:[%s0 + $0x60] sm:$0xff]
  %v39 = vld [vmem:[%s0 + $0x68] sm:$0xff]
  %v40 = vld [vmem:[%s0 + $0x70] sm:$0xff]
  %v41 = vld [vmem:[%s0 + $0x78] sm:$0xff]
  %v42 = vld [vmem:[%s0 + $0x80] sm:$0xff]
  %v43 = vld [vmem:[%s0 + $0x88] sm:$0xff]
  %v44 = vld [vmem:[%s0 + $0x90] sm:$0xff]
  %v45 = vld [vmem:[%s0 + $0x98] sm:$0xff]
  %v46 = vld [vmem:[%s0 + $0xa0] sm:$0xff]
  %v47 = vld [vmem:[%s0 + $0xa8] sm:$0xff]
  %v48 = vld [vmem:[%s0 + $0xb0] sm:$0xff]
  %v49 = vld [vmem:[%s0 + $0xb8] sm:$0xff]
  %v50 = vld [vmem:[%s1] sm:$0xff]
  %v51 = vld [vmem:[%s1 + $0x8] sm:$0xff]
  %v52 = vld [vmem:[%s1 + $0x10] sm:$0xff]
  %v53 = vld [vmem:[%s1 + $0x18] sm:$0xff]
  %v54 = vld [vmem:[%s1 + $0x20] sm:$0xff]
  %v55 = vld [vmem:[%s1 + $0x28] sm:$0xff]
  %v56 = vld [vmem:[%s1 + $0x30] sm:$0xff]
  %v57 = vld [vmem:[%s1 + $0x38] sm:$0xff]
  %v58 = vld [vmem:[%s1 + $0x40] sm:$0xff]
  %v59 = vld [vmem:[%s1 + $0x48] sm:$0xff]
  %v60 = vld [vmem:[%s1 + $0x50] sm:$0xff]
  %v61 = vld [vmem:[%s1 + $0x58] sm:$0xff]
  %v62 = vld [vmem:[%s1 + $0x60] sm:$0xff]
  %v63 = vld [vmem:[%s1 + $0x68] sm:$0xff]
  %v64 = vld [vmem:[%s1 + $0x70] sm:$0xff]
  %v65 = vld [vmem:[%s1 + $0x78] sm:$0xff]
  %v66 = vld [vmem:[%s1 + $0x80] sm:$0xff]
  %v67 = vld [vmem:[%s1 + $0x88] sm:$0xff]
  %v68 = vld [vmem:[%s1 + $0x90] sm:$0xff]
  %v69 = vld [vmem:[%s1 + $0x98] sm:$0xff]
  %v70 = vld [vmem:[%s1 + $0xa0] sm:$0xff]
  %v71 = vld [vmem:[%s1 + $0xa8] sm:$0xff]
  %v72 = vld [vmem:[%s1 + $0xb0] sm:$0xff]
  %v73 = vld [vmem:[%s1 + $0xb8] sm:$0xff]
  %v74 = vld [vmem:[%s1 + $0xc0] sm:$0xff]
  %v75 = vld [vmem:[%s1 + $0xc8] sm:$0xff]
  %v76 = vld [vmem:[%s1 + $0xd0] sm:$0xff]
  %v77 = vld [vmem:[%s1 + $0xd8] sm:$0xff]
  %v78 = vld [vmem:[%s1 + $0xe0] sm:$0xff]
  %v79 = vld [vmem:[%s1 + $0xe8] sm:$0xff]
  %v80 = vld [vmem:[%s1 + $0xf0] sm:$0xff]
  %v81 = vld [vmem:[%s1 + $0xf8] sm:$0xff]
  %v82 = vld [vmem:[%s1 + $0x100] sm:$0xff]
  %v83 = vld [vmem:[%s1 + $0x108] sm:$0xff]
  %v84 = vld [vmem:[%s1 + $0x110] sm:$0xff]
  %v85 = vld [vmem:[%s1 + $0x118] sm:$0xff]
  %v86 = vld [vmem:[%s1 + $0x120] sm:$0xff]
  %v87 = vld [vmem:[%s1 + $0x128] sm:$0xff]
  %v88 = vld [vmem:[%s1 + $0x130] sm:$0xff]
  %v89 = vld [vmem:[%s1 + $0x138] sm:$0xff]
  %v90 = vld [vmem:[%s1 + $0x140] sm:$0xff]
  %v91 = vld [vmem:[%s1 + $0x148] sm:$0xff]
  %v92 = vld [vmem:[%s1 + $0x150] sm:$0xff]
  %v93 = vld [vmem:[%s1 + $0x158] sm:$0xff]
  %v94 = vld [vmem:[%s1 + $0x160] sm:$0xff]
  %v95 = vld [vmem:[%s1 + $0x168] sm:$0xff]
  %v96 = vld [vmem:[%s1 + $0x170] sm:$0xff]
  %v97 = vld [vmem:[%s1 + $0x178] sm:$0xff]
  %v98 = vld [vmem:[%s1 + $0x180] sm:$0xff]
  %v99 = vld [vmem:[%s1 + $0x188] sm:$0xff]
  %v100 = vld [vmem:[%s1 + $0x190] sm:$0xff]
  %v101 = vld [vmem:[%s1 + $0x198] sm:$0xff]
  %v102 = vld [vmem:[%s1 + $0x1a0] sm:$0xff]
  %v103 = vld [vmem:[%s1 + $0x1a8] sm:$0xff]
  %v104 = vld [vmem:[%s1 + $0x1b0] sm:$0xff]
  %v105 = vld [vmem:[%s1 + $0x1b8] sm:$0xff]
  %v106 = vld [vmem:[%s1 + $0x1c0] sm:$0xff]
  %v107 = vld [vmem:[%s1 + $0x1c8] sm:$0xff]
  %v108 = vld [vmem:[%s1 + $0x1d0] sm:$0xff]
  %v109 = vld [vmem:[%s1 + $0x1d8] sm:$0xff]
  %v110 = vld [vmem:[%s1 + $0x1e0] sm:$0xff]
  %v111 = vld [vmem:[%s1 + $0x1e8] sm:$0xff]
  %v112 = vld [vmem:[%s1 + $0x1f0] sm:$0xff]
  %v113 = vld [vmem:[%s1 + $0x1f8] sm:$0xff]
  %v114 = vld [vmem:[%s1 + $0x200] sm:$0xff]
  %v115 = vld [vmem:[%s1 + $0x208] sm:$0xff]
  %v116 = vld [vmem:[%s1 + $0x210] sm:$0xff]
  %v117 = vld [vmem:[%s1 + $0x218] sm:$0xff]
  %v118 = vld [vmem:[%s1 + $0x220] sm:$0xff]
  %v119 = vld [vmem:[%s1 + $0x228] sm:$0xff]
  %v120 = vld [vmem:[%s1 + $0x230] sm:$0xff]
  %v121 = vld [vmem:[%s1 + $0x238] sm:$0xff]
  %v122 = vld [vmem:[%s1 + $0x240] sm:$0xff]
  %v123 = vld [vmem:[%s1 + $0x248] sm:$0xff]
  %v124 = vld [vmem:[%s1 + $0x250] sm:$0xff]
  %v125 = vld [vmem:[%s1 + $0x258] sm:$0xff]
  %v126 = vld [vmem:[%s1 + $0x260] sm:$0xff]
  %v127 = vld [vmem:[%s1 + $0x268] sm:$0xff]
  %v128 = vld [vmem:[%s1 + $0x270] sm:$0xff]
  %v129 = vld [vmem:[%s1 + $0x278] sm:$0xff]
  %v130 = vld [vmem:[%s1 + $0x280] sm:$0xff]
  %v131 = vld [vmem:[%s1 + $0x288] sm:$0xff]
  %v132 = vld [vmem:[%s1 + $0x290] sm:$0xff]
  %v133 = vld [vmem:[%s1 + $0x298] sm:$0xff]
  %v134 = vld [vmem:[%s1 + $0x2a0] sm:$0xff]
  %v135 = vld [vmem:[%s1 + $0x2a8] sm:$0xff]
  %v136 = vld [vmem:[%s1 + $0x2b0] sm:$0xff]
  %v137 = vld [vmem:[%s1 + $0x2b8] sm:$0xff]
  %v138 = vld [vmem:[%s1 + $0x2c0] sm:$0xff]
  %v139 = vld [vmem:[%s1 + $0x2c8] sm:$0xff]
  %v140 = vld [vmem:[%s1 + $0x2d0] sm:$0xff]
  %v141 = vld [vmem:[%s1 + $0x2d8] sm:$0xff]
  %v142 = vld [vmem:[%s1 + $0x2e0] sm:$0xff]
  %v143 = vld [vmem:[%s1 + $0x2e8] sm:$0xff]
  %v144 = vld [vmem:[%s1 + $0x2f0] sm:$0xff]
  %v145 = vld [vmem:[%s1 + $0x2f8] sm:$0xff]
  %v146 = vld [vmem:[%s1 + $0x300] sm:$0xff]
  %v147 = vld [vmem:[%s1 + $0x308] sm:$0xff]
  %v148 = vld [vmem:[%s1 + $0x310] sm:$0xff]
  %v149 = vld [vmem:[%s1 + $0x318] sm:$0xff]
  %v150 = vld [vmem:[%s1 + $0x320] sm:$0xff]
  %v151 = vld [vmem:[%s1 + $0x328] sm:$0xff]
  %v152 = vld [vmem:[%s1 + $0x330] sm:$0xff]
  %v153 = vld [vmem:[%s1 + $0x338] sm:$0xff]
  %v154 = vld [vmem:[%s1 + $0x340] sm:$0xff]
  %v155 = vld [vmem:[%s1 + $0x348] sm:$0xff]
  %v156 = vld [vmem:[%s1 + $0x350] sm:$0xff]
  %v157 = vld [vmem:[%s1 + $0x358] sm:$0xff]
  %v158 = vld [vmem:[%s1 + $0x360] sm:$0xff]
  %v159 = vld [vmem:[%s1 + $0x368] sm:$0xff]
  %v160 = vld [vmem:[%s1 + $0x370] sm:$0xff]
  %v161 = vld [vmem:[%s1 + $0x378] sm:$0xff]
  %v162 = vld [vmem:[%s1 + $0x380] sm:$0xff]
  %v163 = vld [vmem:[%s1 + $0x388] sm:$0xff]
  %v164 = vld [vmem:[%s1 + $0x390] sm:$0xff]
  %v165 = vld [vmem:[%s1 + $0x398] sm:$0xff]
  %v166 = vld [vmem:[%s1 + $0x3a0] sm:$0xff]
  %v167 = vld [vmem:[%s1 + $0x3a8] sm:$0xff]
  %v168 = vld [vmem:[%s1 + $0x3b0] sm:$0xff]
  %v169 = vld [vmem:[%s1 + $0x3b8] sm:$0xff]
  %v170 = vld [vmem:[%s1 + $0x3c0] sm:$0xff]
  %v171 = vld [vmem:[%s1 + $0x3c8] sm:$0xff]
  %v172 = vld [vmem:[%s1 + $0x3d0] sm:$0xff]
  %v173 = vld [vmem:[%s1 + $0x3d8] sm:$0xff]
  %v174 = vld [vmem:[%s1 + $0x3e0] sm:$0xff]
  %v175 = vld [vmem:[%s1 + $0x3e8] sm:$0xff]
  %v176 = vld [vmem:[%s1 + $0x3f0] sm:$0xff]
  %v177 = vld [vmem:[%s1 + $0x3f8] sm:$0xff]
  %v178 = vld [vmem:[%s1 + $0x400] sm:$0xff]
  %v179 = vld [vmem:[%s1 + $0x408] sm:$0xff]
  %v180 = vld [vmem:[%s1 + $0x410] sm:$0xff]
  %v181 = vld [vmem:[%s1 + $0x418] sm:$0xff]
  %v182 = vld [vmem:[%s1 + $0x420] sm:$0xff]
  %v183 = vld [vmem:[%s1 + $0x428] sm:$0xff]
  %v184 = vld [vmem:[%s1 + $0x430] sm:$0xff]
  %v185 = vld [vmem:[%s1 + $0x438] sm:$0xff]
  %v186 = vld [vmem:[%s1 + $0x440] sm:$0xff]
  %v187 = vld [vmem:[%s1 + $0x448] sm:$0xff]
  %v188 = vld [vmem:[%s1 + $0x450] sm:$0xff]
  %v189 = vld [vmem:[%s1 + $0x458] sm:$0xff]
  %v190 = vld [vmem:[%s1 + $0x460] sm:$0xff]
  %v191 = vld [vmem:[%s1 + $0x468] sm:$0xff]
  %v192 = vld [vmem:[%s1 + $0x470] sm:$0xff]
  %v193 = vld [vmem:[%s1 + $0x478] sm:$0xff]
  %v194 = vld [vmem:[%s1 + $0x480] sm:$0xff]
  %v195 = vld [vmem:[%s1 + $0x488] sm:$0xff]
  %v196 = vld [vmem:[%s1 + $0x490] sm:$0xff]
  %v197 = vld [vmem:[%s1 + $0x498] sm:$0xff]
  %v198 = vld [vmem:[%s1 + $0x4a0] sm:$0xff]
  %v199 = vld [vmem:[%s1 + $0x4a8] sm:$0xff]
  %v200 = vld [vmem:[%s1 + $0x4b0] sm:$0xff]
  %v201 = vld [vmem:[%s1 + $0x4b8] sm:$0xff]
  %v202 = vld [vmem:[%s1 + $0x4c0] sm:$0xff]
  %v203 = vld [vmem:[%s1 + $0x4c8] sm:$0xff]
  %v204 = vld [vmem:[%s1 + $0x4d0] sm:$0xff]
  %v205 = vld [vmem:[%s1 + $0x4d8] sm:$0xff]
  %v206 = vld [vmem:[%s1 + $0x4e0] sm:$0xff]
  %v207 = vld [vmem:[%s1 + $0x4e8] sm:$0xff]
  %v208 = vld [vmem:[%s1 + $0x4f0] sm:$0xff]
  %v209 = vld [vmem:[%s1 + $0x4f8] sm:$0xff]
  %v210 = vld [vmem:[%s1 + $0x500] sm:$0xff]
  %v211 = vld [vmem:[%s1 + $0x508] sm:$0xff]
  %v212 = vld [vmem:[%s1 + $0x510] sm:$0xff]
  %v213 = vld [vmem:[%s1 + $0x518] sm:$0xff]
  %v214 = vld [vmem:[%s1 + $0x520] sm:$0xff]
  %v215 = vld [vmem:[%s1 + $0x528] sm:$0xff]
  %v216 = vld [vmem:[%s1 + $0x530] sm:$0xff]
  %v217 = vld [vmem:[%s1 + $0x538] sm:$0xff]
  %v218 = vld [vmem:[%s1 + $0x540] sm:$0xff]
  %v219 = vld [vmem:[%s1 + $0x548] sm:$0xff]
  %v220 = vld [vmem:[%s1 + $0x550] sm:$0xff]
  %v221 = vld [vmem:[%s1 + $0x558] sm:$0xff]
  %v222 = vld [vmem:[%s1 + $0x560] sm:$0xff]
  %v223 = vld [vmem:[%s1 + $0x568] sm:$0xff]
  %v224 = vld [vmem:[%s1 + $0x570] sm:$0xff]
  %v225 = vld [vmem:[%s1 + $0x578] sm:$0xff]
  %v226 = vld [vmem:[%s1 + $0x580] sm:$0xff]
  %v227 = vld [vmem:[%s1 + $0x588] sm:$0xff]
  %v228 = vld [vmem:[%s1 + $0x590] sm:$0xff]
  %v229 = vld [vmem:[%s1 + $0x598] sm:$0xff]
  %v230 = vld [vmem:[%s1 + $0x5a0] sm:$0xff]
  %v231 = vld [vmem:[%s1 + $0x5a8] sm:$0xff]
  %v232 = vld [vmem:[%s1 + $0x5b0] sm:$0xff]
  %v233 = vld [vmem:[%s1 + $0x5b8] sm:$0xff]
  %v234 = vld [vmem:[%s1 + $0x5c0] sm:$0xff]
  %v235 = vld [vmem:[%s1 + $0x5c8] sm:$0xff]
  %v236 = vld [vmem:[%s1 + $0x5d0] sm:$0xff]
  %v237 = vld [vmem:[%s1 + $0x5d8] sm:$0xff]
  %v238 = vld [vmem:[%s1 + $0x5e0] sm:$0xff]
  %v239 = vld [vmem:[%s1 + $0x5e8] sm:$0xff]
  %v240 = vld [vmem:[%s1 + $0x5f0] sm:$0xff]
  %v241 = vld [vmem:[%s1 + $0x5f8] sm:$0xff]
  %v242 = vld [vmem:[%s1 + $0x600] sm:$0xff]
  %v243 = vld [vmem:[%s1 + $0x608] sm:$0xff]
  %v244 = vld [vmem:[%s1 + $0x610] sm:$0xff]
  %v245 = vld [vmem:[%s1 + $0x618] sm:$0xff]
  %v246 = vld [vmem:[%s1 + $0x620] sm:$0xff]
  %v247 = vld [vmem:[%s1 + $0x628] sm:$0xff]
  %v248 = vld [vmem:[%s1 + $0x630] sm:$0xff]
  %v249 = vld [vmem:[%s1 + $0x638] sm:$0xff]
  %v250 = vld [vmem:[%s1 + $0x640] sm:$0xff]
  %v251 = vld [vmem:[%s1 + $0x648] sm:$0xff]
  %v252 = vld [vmem:[%s1 + $0x650] sm:$0xff]
  %v253 = vld [vmem:[%s1 + $0x658] sm:$0xff]
  %v254 = vld [vmem:[%s1 + $0x660] sm:$0xff]
  %v255 = vld [vmem:[%s1 + $0x668] sm:$0xff]
  %v256 = vld [vmem:[%s1 + $0x670] sm:$0xff]
  %v257 = vld [vmem:[%s1 + $0x678] sm:$0xff]
  %v258 = vld [vmem:[%s1 + $0x680] sm:$0xff]
  %v259 = vld [vmem:[%s1 + $0x688] sm:$0xff]
  %v260 = vld [vmem:[%s1 + $0x690] sm:$0xff]
  %v261 = vld [vmem:[%s1 + $0x698] sm:$0xff]
  %v262 = vld [vmem:[%s1 + $0x6a0] sm:$0xff]
  %v263 = vld [vmem:[%s1 + $0x6a8] sm:$0xff]
  %v264 = vld [vmem:[%s1 + $0x6b0] sm:$0xff]
  %v265 = vld [vmem:[%s1 + $0x6b8] sm:$0xff]
  %v266 = vld [vmem:[%s1 + $0x6c0] sm:$0xff]
  %v267 = vld [vmem:[%s1 + $0x6c8] sm:$0xff]
  %v268 = vld [vmem:[%s1 + $0x6d0] sm:$0xff]
  %v269 = vld [vmem:[%s1 + $0x6d8] sm:$0xff]
  %v270 = vld [vmem:[%s1 + $0x6e0] sm:$0xff]
  %v271 = vld [vmem:[%s1 + $0x6e8] sm:$0xff]
  %v272 = vld [vmem:[%s1 + $0x6f0] sm:$0xff]
  %v273 = vld [vmem:[%s1 + $0x6f8] sm:$0xff]
  %v274 = vld [vmem:[%s1 + $0x700] sm:$0xff]
  %v275 = vld [vmem:[%s1 + $0x708] sm:$0xff]
  %v276 = vld [vmem:[%s1 + $0x710] sm:$0xff]
  %v277 = vld [vmem:[%s1 + $0x718] sm:$0xff]
  %v278 = vld [vmem:[%s1 + $0x720] sm:$0xff]
  %v279 = vld [vmem:[%s1 + $0x728] sm:$0xff]
  %v280 = vld [vmem:[%s1 + $0x730] sm:$0xff]
  %v281 = vld [vmem:[%s1 + $0x738] sm:$0xff]
  %v282 = vld [vmem:[%s1 + $0x740] sm:$0xff]
  %v283 = vld [vmem:[%s1 + $0x748] sm:$0xff]
  %v284 = vld [vmem:[%s1 + $0x750] sm:$0xff]
  %v285 = vld [vmem:[%s1 + $0x758] sm:$0xff]
  %v286 = vld [vmem:[%s1 + $0x760] sm:$0xff]
  %v287 = vld [vmem:[%s1 + $0x768] sm:$0xff]
  %v288 = vld [vmem:[%s1 + $0x770] sm:$0xff]
  %v289 = vld [vmem:[%s1 + $0x778] sm:$0xff]
  %v290 = vld [vmem:[%s1 + $0x780] sm:$0xff]
  %v291 = vld [vmem:[%s1 + $0x788] sm:$0xff]
  %v292 = vld [vmem:[%s1 + $0x790] sm:$0xff]
  %v293 = vld [vmem:[%s1 + $0x798] sm:$0xff]
  %v294 = vld [vmem:[%s1 + $0x7a0] sm:$0xff]
  %v295 = vld [vmem:[%s1 + $0x7a8] sm:$0xff]
  %v296 = vld [vmem:[%s1 + $0x7b0] sm:$0xff]
  %v297 = vld [vmem:[%s1 + $0x7b8] sm:$0xff]
  %v298 = vld [vmem:[%s1 + $0x7c0] sm:$0xff]
  %v299 = vld [vmem:[%s1 + $0x7c8] sm:$0xff]
  %v300 = vld [vmem:[%s1 + $0x7d0] sm:$0xff]
  %v301 = vld [vmem:[%s1 + $0x7d8] sm:$0xff]
  %v302 = vld [vmem:[%s1 + $0x7e0] sm:$0xff]
  %v303 = vld [vmem:[%s1 + $0x7e8] sm:$0xff]
  %v304 = vld [vmem:[%s1 + $0x7f0] sm:$0xff]
  %v305 = vld [vmem:[%s1 + $0x7f8] sm:$0xff]
  %v306 = vld [vmem:[%s1 + $0x800] sm:$0xff]
  %v307 = vld [vmem:[%s1 + $0x808] sm:$0xff]
  %v308 = vld [vmem:[%s1 + $0x810] sm:$0xff]
  %v309 = vld [vmem:[%s1 + $0x818] sm:$0xff]
  %v310 = vld [vmem:[%s1 + $0x820] sm:$0xff]
  %v311 = vld [vmem:[%s1 + $0x828] sm:$0xff]
  %v312 = vld [vmem:[%s1 + $0x830] sm:$0xff]
  %v313 = vld [vmem:[%s1 + $0x838] sm:$0xff]
  %v314 = vld [vmem:[%s1 + $0x840] sm:$0xff]
  %v315 = vld [vmem:[%s1 + $0x848] sm:$0xff]
  %v316 = vld [vmem:[%s1 + $0x850] sm:$0xff]
  %v317 = vld [vmem:[%s1 + $0x858] sm:$0xff]
  %v318 = vld [vmem:[%s1 + $0x860] sm:$0xff]
  %v319 = vld [vmem:[%s1 + $0x868] sm:$0xff]
  %v320 = vld [vmem:[%s1 + $0x870] sm:$0xff]
  %v321 = vld [vmem:[%s1 + $0x878] sm:$0xff]
  %v322 = vld [vmem:[%s1 + $0x880] sm:$0xff]
  %v323 = vld [vmem:[%s1 + $0x888] sm:$0xff]
  %v324 = vld [vmem:[%s1 + $0x890] sm:$0xff]
  %v325 = vld [vmem:[%s1 + $0x898] sm:$0xff]
  %v326 = vld [vmem:[%s1 + $0x8a0] sm:$0xff]
  %v327 = vld [vmem:[%s1 + $0x8a8] sm:$0xff]
  %v328 = vld [vmem:[%s1 + $0x8b0] sm:$0xff]
  %v329 = vld [vmem:[%s1 + $0x8b8] sm:$0xff]
  %v330 = vld [vmem:[%s1 + $0x8c0] sm:$0xff]
  %v331 = vld [vmem:[%s1 + $0x8c8] sm:$0xff]
  %v332 = vld [vmem:[%s1 + $0x8d0] sm:$0xff]
  %v333 = vld [vmem:[%s1 + $0x8d8] sm:$0xff]
  %v334 = vld [vmem:[%s1 + $0x8e0] sm:$0xff]
  %v335 = vld [vmem:[%s1 + $0x8e8] sm:$0xff]
  %v336 = vld [vmem:[%s1 + $0x8f0] sm:$0xff]
  %v337 = vld [vmem:[%s1 + $0x8f8] sm:$0xff]
  %v338 = vld [vmem:[%s1 + $0x900] sm:$0xff]
  %v339 = vld [vmem:[%s1 + $0x908] sm:$0xff]
  %v340 = vld [vmem:[%s1 + $0x910] sm:$0xff]
  %v341 = vld [vmem:[%s1 + $0x918] sm:$0xff]
  %v342 = vld [vmem:[%s1 + $0x920] sm:$0xff]
  %v343 = vld [vmem:[%s1 + $0x928] sm:$0xff]
  %v344 = vld [vmem:[%s1 + $0x930] sm:$0xff]
  %v345 = vld [vmem:[%s1 + $0x938] sm:$0xff]
  %v346 = vld [vmem:[%s1 + $0x940] sm:$0xff]
  %v347 = vld [vmem:[%s1 + $0x948] sm:$0xff]
  %v348 = vld [vmem:[%s1 + $0x950] sm:$0xff]
  %v349 = vld [vmem:[%s1 + $0x958] sm:$0xff]
  %v350 = vld [vmem:[%s1 + $0x960] sm:$0xff]
  %v351 = vld [vmem:[%s1 + $0x968] sm:$0xff]
  %v352 = vld [vmem:[%s1 + $0x970] sm:$0xff]
  %v353 = vld [vmem:[%s1 + $0x978] sm:$0xff]
  %v354 = vld [vmem:[%s1 + $0x980] sm:$0xff]
  %v355 = vld [vmem:[%s1 + $0x988] sm:$0xff]
  %v356 = vld [vmem:[%s1 + $0x990] sm:$0xff]
  %v357 = vld [vmem:[%s1 + $0x998] sm:$0xff]
  %v358 = vld [vmem:[%s1 + $0x9a0] sm:$0xff]
  %v359 = vld [vmem:[%s1 + $0x9a8] sm:$0xff]
  %v360 = vld [vmem:[%s1 + $0x9b0] sm:$0xff]
  %v361 = vld [vmem:[%s1 + $0x9b8] sm:$0xff]
  %v362 = vld [vmem:[%s1 + $0x9c0] sm:$0xff]
  %v363 = vld [vmem:[%s1 + $0x9c8] sm:$0xff]
  %v364 = vld [vmem:[%s1 + $0x9d0] sm:$0xff]
  %v365 = vld [vmem:[%s1 + $0x9d8] sm:$0xff]
  %v366 = vld [vmem:[%s1 + $0x9e0] sm:$0xff]
  %v367 = vld [vmem:[%s1 + $0x9e8] sm:$0xff]
  %v368 = vld [vmem:[%s1 + $0x9f0] sm:$0xff]
  %v369 = vld [vmem:[%s1 + $0x9f8] sm:$0xff]
  %v370 = vld [vmem:[%s1 + $0xa00] sm:$0xff]
  %v371 = vld [vmem:[%s1 + $0xa08] sm:$0xff]
  %v372 = vld [vmem:[%s1 + $0xa10] sm:$0xff]
  %v373 = vld [vmem:[%s1 + $0xa18] sm:$0xff]
  %v374 = vld [vmem:[%s1 + $0xa20] sm:$0xff]
  %v375 = vld [vmem:[%s1 + $0xa28] sm:$0xff]
  %v376 = vld [vmem:[%s1 + $0xa30] sm:$0xff]
  %v377 = vld [vmem:[%s1 + $0xa38] sm:$0xff]
  %v378 = vld [vmem:[%s1 + $0xa40] sm:$0xff]
  %v379 = vld [vmem:[%s1 + $0xa48] sm:$0xff]
  %v380 = vld [vmem:[%s1 + $0xa50] sm:$0xff]
  %v381 = vld [vmem:[%s1 + $0xa58] sm:$0xff]
  %v382 = vld [vmem:[%s1 + $0xa60] sm:$0xff]
  %v383 = vld [vmem:[%s1 + $0xa68] sm:$0xff]
  %v384 = vld [vmem:[%s1 + $0xa70] sm:$0xff]
  %v385 = vld [vmem:[%s1 + $0xa78] sm:$0xff]
  %v386 = vld [vmem:[%s1 + $0xa80] sm:$0xff]
  %v387 = vld [vmem:[%s1 + $0xa88] sm:$0xff]
  %v388 = vld [vmem:[%s1 + $0xa90] sm:$0xff]
  %v389 = vld [vmem:[%s1 + $0xa98] sm:$0xff]
  %v390 = vld [vmem:[%s1 + $0xaa0] sm:$0xff]
  %v391 = vld [vmem:[%s1 + $0xaa8] sm:$0xff]
  %v392 = vld [vmem:[%s1 + $0xab0] sm:$0xff]
  %v393 = vld [vmem:[%s1 + $0xab8] sm:$0xff]
  %v394 = vld [vmem:[%s1 + $0xac0] sm:$0xff]
  %v395 = vld [vmem:[%s1 + $0xac8] sm:$0xff]
  %v396 = vld [vmem:[%s1 + $0xad0] sm:$0xff]
  %v397 = vld [vmem:[%s1 + $0xad8] sm:$0xff]
  %v398 = vld [vmem:[%s1 + $0xae0] sm:$0xff]
  %v399 = vld [vmem:[%s1 + $0xae8] sm:$0xff]
  %v400 = vld [vmem:[%s1 + $0xaf0] sm:$0xff]
  %v401 = vld [vmem:[%s1 + $0xaf8] sm:$0xff]
  %v402 = vld [vmem:[%s1 + $0xb00] sm:$0xff]
  %v403 = vld [vmem:[%s1 + $0xb08] sm:$0xff]
  %v404 = vld [vmem:[%s1 + $0xb10] sm:$0xff]
  %v405 = vld [vmem:[%s1 + $0xb18] sm:$0xff]
  %v406 = vld [vmem:[%s1 + $0xb20] sm:$0xff]
  %v407 = vld [vmem:[%s1 + $0xb28] sm:$0xff]
  %v408 = vld [vmem:[%s1 + $0xb30] sm:$0xff]
  %v409 = vld [vmem:[%s1 + $0xb38] sm:$0xff]
  %v410 = vld [vmem:[%s1 + $0xb40] sm:$0xff]
  %v411 = vld [vmem:[%s1 + $0xb48] sm:$0xff]
  %v412 = vld [vmem:[%s1 + $0xb50] sm:$0xff]
  %v413 = vld [vmem:[%s1 + $0xb58] sm:$0xff]
  %v414 = vld [vmem:[%s1 + $0xb60] sm:$0xff]
  %v415 = vld [vmem:[%s1 + $0xb68] sm:$0xff]
  %v416 = vld [vmem:[%s1 + $0xb70] sm:$0xff]
  %v417 = vld [vmem:[%s1 + $0xb78] sm:$0xff]
  %v418 = vld [vmem:[%s1 + $0xb80] sm:$0xff]
  %v419 = vld [vmem:[%s1 + $0xb88] sm:$0xff]
  %v420 = vld [vmem:[%s1 + $0xb90] sm:$0xff]
  %v421 = vld [vmem:[%s1 + $0xb98] sm:$0xff]
  %v422 = vld [vmem:[%s1 + $0xba0] sm:$0xff]
  %v423 = vld [vmem:[%s1 + $0xba8] sm:$0xff]
  %v424 = vld [vmem:[%s1 + $0xbb0] sm:$0xff]
  %v425 = vld [vmem:[%s1 + $0xbb8] sm:$0xff]
  %v426 = vld [vmem:[%s1 + $0xbc0] sm:$0xff]
  %v427 = vld [vmem:[%s1 + $0xbc8] sm:$0xff]
  %v428 = vld [vmem:[%s1 + $0xbd0] sm:$0xff]
  %v429 = vld [vmem:[%s1 + $0xbd8] sm:$0xff]
  %v430 = vld [vmem:[%s1 + $0xbe0] sm:$0xff]
  %v431 = vld [vmem:[%s1 + $0xbe8] sm:$0xff]
  %v432 = vld [vmem:[%s1 + $0xbf0] sm:$0xff]
  %v433 = vld [vmem:[%s1 + $0xbf8] sm:$0xff]
  %v434 = vld [vmem:[%s2] sm:$0x3]
  %v436 = vperm.slane %v434, 0
  %v437 = vperm.slane %v434, 1
  %v464 = vunpack.c.l.b16 %v26
  %v465 = vunpack.c.h.b16 %v26
  %v466 = vunpack.c.l.b16 %v27
  %v467 = vunpack.c.h.b16 %v27
  %v468 = vunpack.c.l.b16 %v28
  %v469 = vunpack.c.h.b16 %v28
  %v470 = vunpack.c.l.b16 %v29
  %v471 = vunpack.c.h.b16 %v29
  %v472 = vunpack.c.l.b16 %v30
  %v473 = vunpack.c.h.b16 %v30
  %v474 = vunpack.c.l.b16 %v31
  %v475 = vunpack.c.h.b16 %v31
  %v476 = vunpack.c.l.b16 %v32
  %v477 = vunpack.c.h.b16 %v32
  %v478 = vunpack.c.l.b16 %v33
  %v479 = vunpack.c.h.b16 %v33
  %v480 = vunpack.c.l.b16 %v34
  %v481 = vunpack.c.h.b16 %v34
  %v482 = vunpack.c.l.b16 %v35
  %v483 = vunpack.c.h.b16 %v35
  %v484 = vunpack.c.l.b16 %v36
  %v485 = vunpack.c.h.b16 %v36
  %v486 = vunpack.c.l.b16 %v37
  %v487 = vunpack.c.h.b16 %v37
  %v488 = vunpack.c.l.b16 %v38
  %v489 = vunpack.c.h.b16 %v38
  %v490 = vunpack.c.l.b16 %v39
  %v491 = vunpack.c.h.b16 %v39
  %v492 = vunpack.c.l.b16 %v40
  %v493 = vunpack.c.h.b16 %v40
  %v494 = vunpack.c.l.b16 %v41
  %v495 = vunpack.c.h.b16 %v41
  %v496 = vunpack.c.l.b16 %v42
  %v497 = vunpack.c.h.b16 %v42
  %v498 = vunpack.c.l.b16 %v43
  %v499 = vunpack.c.h.b16 %v43
  %v500 = vunpack.c.l.b16 %v44
  %v501 = vunpack.c.h.b16 %v44
  %v502 = vunpack.c.l.b16 %v45
  %v503 = vunpack.c.h.b16 %v45
  %v504 = vunpack.c.l.b16 %v46
  %v505 = vunpack.c.h.b16 %v46
  %v506 = vunpack.c.l.b16 %v47
  %v507 = vunpack.c.h.b16 %v47
  %v508 = vunpack.c.l.b16 %v48
  %v509 = vunpack.c.h.b16 %v48
  %v510 = vunpack.c.l.b16 %v49
  %v511 = vunpack.c.h.b16 %v49
  %v512 = vpack.c.b16 %v488, %v464
  %v513 = vpack.c.b16 %v489, %v465
  %v514 = vpack.c.b16 %v490, %v466
  %v515 = vpack.c.b16 %v491, %v467
  %v516 = vpack.c.b16 %v492, %v468
  %v517 = vpack.c.b16 %v493, %v469
  %v518 = vpack.c.b16 %v494, %v470
  %v519 = vpack.c.b16 %v495, %v471
  %v520 = vpack.c.b16 %v496, %v472
  %v521 = vpack.c.b16 %v497, %v473
  %v522 = vpack.c.b16 %v498, %v474
  %v523 = vpack.c.b16 %v499, %v475
  %v524 = vpack.c.b16 %v500, %v476
  %v525 = vpack.c.b16 %v501, %v477
  %v526 = vpack.c.b16 %v502, %v478
  %v527 = vpack.c.b16 %v503, %v479
  %v528 = vpack.c.b16 %v504, %v480
  %v529 = vpack.c.b16 %v505, %v481
  %v530 = vpack.c.b16 %v506, %v482
  %v531 = vpack.c.b16 %v507, %v483
  %v532 = vpack.c.b16 %v508, %v484
  %v533 = vpack.c.b16 %v509, %v485
  %v534 = vpack.c.b16 %v510, %v486
  %v535 = vpack.c.b16 %v511, %v487
  %v944 = vunpack.c.l.b16 %v50
  %v945 = vunpack.c.h.b16 %v50
  %v946 = vunpack.c.l.b16 %v51
  %v947 = vunpack.c.h.b16 %v51
  %v948 = vunpack.c.l.b16 %v52
  %v949 = vunpack.c.h.b16 %v52
  %v950 = vunpack.c.l.b16 %v53
  %v951 = vunpack.c.h.b16 %v53
  %v952 = vunpack.c.l.b16 %v54
  %v953 = vunpack.c.h.b16 %v54
  %v954 = vunpack.c.l.b16 %v55
  %v955 = vunpack.c.h.b16 %v55
  %v956 = vunpack.c.l.b16 %v56
  %v957 = vunpack.c.h.b16 %v56
  %v958 = vunpack.c.l.b16 %v57
  %v959 = vunpack.c.h.b16 %v57
  %v960 = vunpack.c.l.b16 %v58
  %v961 = vunpack.c.h.b16 %v58
  %v962 = vunpack.c.l.b16 %v59
  %v963 = vunpack.c.h.b16 %v59
  %v964 = vunpack.c.l.b16 %v60
  %v965 = vunpack.c.h.b16 %v60
  %v966 = vunpack.c.l.b16 %v61
  %v967 = vunpack.c.h.b16 %v61
  %v968 = vunpack.c.l.b16 %v62
  %v969 = vunpack.c.h.b16 %v62
  %v970 = vunpack.c.l.b16 %v63
  %v971 = vunpack.c.h.b16 %v63
  %v972 = vunpack.c.l.b16 %v64
  %v973 = vunpack.c.h.b16 %v64
  %v974 = vunpack.c.l.b16 %v65
  %v975 = vunpack.c.h.b16 %v65
  %v976 = vunpack.c.l.b16 %v66
  %v977 = vunpack.c.h.b16 %v66
  %v978 = vunpack.c.l.b16 %v67
  %v979 = vunpack.c.h.b16 %v67
  %v980 = vunpack.c.l.b16 %v68
  %v981 = vunpack.c.h.b16 %v68
  %v982 = vunpack.c.l.b16 %v69
  %v983 = vunpack.c.h.b16 %v69
  %v984 = vunpack.c.l.b16 %v70
  %v985 = vunpack.c.h.b16 %v70
  %v986 = vunpack.c.l.b16 %v71
  %v987 = vunpack.c.h.b16 %v71
  %v988 = vunpack.c.l.b16 %v72
  %v989 = vunpack.c.h.b16 %v72
  %v990 = vunpack.c.l.b16 %v73
  %v991 = vunpack.c.h.b16 %v73
  %v992 = vunpack.c.l.b16 %v74
  %v993 = vunpack.c.h.b16 %v74
  %v994 = vunpack.c.l.b16 %v75
  %v995 = vunpack.c.h.b16 %v75
  %v996 = vunpack.c.l.b16 %v76
  %v997 = vunpack.c.h.b16 %v76
  %v998 = vunpack.c.l.b16 %v77
  %v999 = vunpack.c.h.b16 %v77
  %v1000 = vunpack.c.l.b16 %v78
  %v1001 = vunpack.c.h.b16 %v78
  %v1002 = vunpack.c.l.b16 %v79
  %v1003 = vunpack.c.h.b16 %v79
  %v1004 = vunpack.c.l.b16 %v80
  %v1005 = vunpack.c.h.b16 %v80
  %v1006 = vunpack.c.l.b16 %v81
  %v1007 = vunpack.c.h.b16 %v81
  %v1008 = vunpack.c.l.b16 %v82
  %v1009 = vunpack.c.h.b16 %v82
  %v1010 = vunpack.c.l.b16 %v83
  %v1011 = vunpack.c.h.b16 %v83
  %v1012 = vunpack.c.l.b16 %v84
  %v1013 = vunpack.c.h.b16 %v84
  %v1014 = vunpack.c.l.b16 %v85
  %v1015 = vunpack.c.h.b16 %v85
  %v1016 = vunpack.c.l.b16 %v86
  %v1017 = vunpack.c.h.b16 %v86
  %v1018 = vunpack.c.l.b16 %v87
  %v1019 = vunpack.c.h.b16 %v87
  %v1020 = vunpack.c.l.b16 %v88
  %v1021 = vunpack.c.h.b16 %v88
  %v1022 = vunpack.c.l.b16 %v89
  %v1023 = vunpack.c.h.b16 %v89
  %v1024 = vunpack.c.l.b16 %v90
  %v1025 = vunpack.c.h.b16 %v90
  %v1026 = vunpack.c.l.b16 %v91
  %v1027 = vunpack.c.h.b16 %v91
  %v1028 = vunpack.c.l.b16 %v92
  %v1029 = vunpack.c.h.b16 %v92
  %v1030 = vunpack.c.l.b16 %v93
  %v1031 = vunpack.c.h.b16 %v93
  %v1032 = vunpack.c.l.b16 %v94
  %v1033 = vunpack.c.h.b16 %v94
  %v1034 = vunpack.c.l.b16 %v95
  %v1035 = vunpack.c.h.b16 %v95
  %v1036 = vunpack.c.l.b16 %v96
  %v1037 = vunpack.c.h.b16 %v96
  %v1038 = vunpack.c.l.b16 %v97
  %v1039 = vunpack.c.h.b16 %v97
  %v1040 = vunpack.c.l.b16 %v98
  %v1041 = vunpack.c.h.b16 %v98
  %v1042 = vunpack.c.l.b16 %v99
  %v1043 = vunpack.c.h.b16 %v99
  %v1044 = vunpack.c.l.b16 %v100
  %v1045 = vunpack.c.h.b16 %v100
  %v1046 = vunpack.c.l.b16 %v101
  %v1047 = vunpack.c.h.b16 %v101
  %v1048 = vunpack.c.l.b16 %v102
  %v1049 = vunpack.c.h.b16 %v102
  %v1050 = vunpack.c.l.b16 %v103
  %v1051 = vunpack.c.h.b16 %v103
  %v1052 = vunpack.c.l.b16 %v104
  %v1053 = vunpack.c.h.b16 %v104
  %v1054 = vunpack.c.l.b16 %v105
  %v1055 = vunpack.c.h.b16 %v105
  %v1056 = vunpack.c.l.b16 %v106
  %v1057 = vunpack.c.h.b16 %v106
  %v1058 = vunpack.c.l.b16 %v107
  %v1059 = vunpack.c.h.b16 %v107
  %v1060 = vunpack.c.l.b16 %v108
  %v1061 = vunpack.c.h.b16 %v108
  %v1062 = vunpack.c.l.b16 %v109
  %v1063 = vunpack.c.h.b16 %v109
  %v1064 = vunpack.c.l.b16 %v110
  %v1065 = vunpack.c.h.b16 %v110
  %v1066 = vunpack.c.l.b16 %v111
  %v1067 = vunpack.c.h.b16 %v111
  %v1068 = vunpack.c.l.b16 %v112
  %v1069 = vunpack.c.h.b16 %v112
  %v1070 = vunpack.c.l.b16 %v113
  %v1071 = vunpack.c.h.b16 %v113
  %v1072 = vunpack.c.l.b16 %v114
  %v1073 = vunpack.c.h.b16 %v114
  %v1074 = vunpack.c.l.b16 %v115
  %v1075 = vunpack.c.h.b16 %v115
  %v1076 = vunpack.c.l.b16 %v116
  %v1077 = vunpack.c.h.b16 %v116
  %v1078 = vunpack.c.l.b16 %v117
  %v1079 = vunpack.c.h.b16 %v117
  %v1080 = vunpack.c.l.b16 %v118
  %v1081 = vunpack.c.h.b16 %v118
  %v1082 = vunpack.c.l.b16 %v119
  %v1083 = vunpack.c.h.b16 %v119
  %v1084 = vunpack.c.l.b16 %v120
  %v1085 = vunpack.c.h.b16 %v120
  %v1086 = vunpack.c.l.b16 %v121
  %v1087 = vunpack.c.h.b16 %v121
  %v1088 = vunpack.c.l.b16 %v122
  %v1089 = vunpack.c.h.b16 %v122
  %v1090 = vunpack.c.l.b16 %v123
  %v1091 = vunpack.c.h.b16 %v123
  %v1092 = vunpack.c.l.b16 %v124
  %v1093 = vunpack.c.h.b16 %v124
  %v1094 = vunpack.c.l.b16 %v125
  %v1095 = vunpack.c.h.b16 %v125
  %v1096 = vunpack.c.l.b16 %v126
  %v1097 = vunpack.c.h.b16 %v126
  %v1098 = vunpack.c.l.b16 %v127
  %v1099 = vunpack.c.h.b16 %v127
  %v1100 = vunpack.c.l.b16 %v128
  %v1101 = vunpack.c.h.b16 %v128
  %v1102 = vunpack.c.l.b16 %v129
  %v1103 = vunpack.c.h.b16 %v129
  %v1104 = vunpack.c.l.b16 %v130
  %v1105 = vunpack.c.h.b16 %v130
  %v1106 = vunpack.c.l.b16 %v131
  %v1107 = vunpack.c.h.b16 %v131
  %v1108 = vunpack.c.l.b16 %v132
  %v1109 = vunpack.c.h.b16 %v132
  %v1110 = vunpack.c.l.b16 %v133
  %v1111 = vunpack.c.h.b16 %v133
  %v1112 = vunpack.c.l.b16 %v134
  %v1113 = vunpack.c.h.b16 %v134
  %v1114 = vunpack.c.l.b16 %v135
  %v1115 = vunpack.c.h.b16 %v135
  %v1116 = vunpack.c.l.b16 %v136
  %v1117 = vunpack.c.h.b16 %v136
  %v1118 = vunpack.c.l.b16 %v137
  %v1119 = vunpack.c.h.b16 %v137
  %v1120 = vunpack.c.l.b16 %v138
  %v1121 = vunpack.c.h.b16 %v138
  %v1122 = vunpack.c.l.b16 %v139
  %v1123 = vunpack.c.h.b16 %v139
  %v1124 = vunpack.c.l.b16 %v140
  %v1125 = vunpack.c.h.b16 %v140
  %v1126 = vunpack.c.l.b16 %v141
  %v1127 = vunpack.c.h.b16 %v141
  %v1128 = vunpack.c.l.b16 %v142
  %v1129 = vunpack.c.h.b16 %v142
  %v1130 = vunpack.c.l.b16 %v143
  %v1131 = vunpack.c.h.b16 %v143
  %v1132 = vunpack.c.l.b16 %v144
  %v1133 = vunpack.c.h.b16 %v144
  %v1134 = vunpack.c.l.b16 %v145
  %v1135 = vunpack.c.h.b16 %v145
  %v1136 = vunpack.c.l.b16 %v146
  %v1137 = vunpack.c.h.b16 %v146
  %v1138 = vunpack.c.l.b16 %v147
  %v1139 = vunpack.c.h.b16 %v147
  %v1140 = vunpack.c.l.b16 %v148
  %v1141 = vunpack.c.h.b16 %v148
  %v1142 = vunpack.c.l.b16 %v149
  %v1143 = vunpack.c.h.b16 %v149
  %v1144 = vunpack.c.l.b16 %v150
  %v1145 = vunpack.c.h.b16 %v150
  %v1146 = vunpack.c.l.b16 %v151
  %v1147 = vunpack.c.h.b16 %v151
  %v1148 = vunpack.c.l.b16 %v152
  %v1149 = vunpack.c.h.b16 %v152
  %v1150 = vunpack.c.l.b16 %v153
  %v1151 = vunpack.c.h.b16 %v153
  %v1152 = vunpack.c.l.b16 %v154
  %v1153 = vunpack.c.h.b16 %v154
  %v1154 = vunpack.c.l.b16 %v155
  %v1155 = vunpack.c.h.b16 %v155
  %v1156 = vunpack.c.l.b16 %v156
  %v1157 = vunpack.c.h.b16 %v156
  %v1158 = vunpack.c.l.b16 %v157
  %v1159 = vunpack.c.h.b16 %v157
  %v1160 = vunpack.c.l.b16 %v158
  %v1161 = vunpack.c.h.b16 %v158
  %v1162 = vunpack.c.l.b16 %v159
  %v1163 = vunpack.c.h.b16 %v159
  %v1164 = vunpack.c.l.b16 %v160
  %v1165 = vunpack.c.h.b16 %v160
  %v1166 = vunpack.c.l.b16 %v161
  %v1167 = vunpack.c.h.b16 %v161
  %v1168 = vunpack.c.l.b16 %v162
  %v1169 = vunpack.c.h.b16 %v162
  %v1170 = vunpack.c.l.b16 %v163
  %v1171 = vunpack.c.h.b16 %v163
  %v1172 = vunpack.c.l.b16 %v164
  %v1173 = vunpack.c.h.b16 %v164
  %v1174 = vunpack.c.l.b16 %v165
  %v1175 = vunpack.c.h.b16 %v165
  %v1176 = vunpack.c.l.b16 %v166
  %v1177 = vunpack.c.h.b16 %v166
  %v1178 = vunpack.c.l.b16 %v167
  %v1179 = vunpack.c.h.b16 %v167
  %v1180 = vunpack.c.l.b16 %v168
  %v1181 = vunpack.c.h.b16 %v168
  %v1182 = vunpack.c.l.b16 %v169
  %v1183 = vunpack.c.h.b16 %v169
  %v1184 = vunpack.c.l.b16 %v170
  %v1185 = vunpack.c.h.b16 %v170
  %v1186 = vunpack.c.l.b16 %v171
  %v1187 = vunpack.c.h.b16 %v171
  %v1188 = vunpack.c.l.b16 %v172
  %v1189 = vunpack.c.h.b16 %v172
  %v1190 = vunpack.c.l.b16 %v173
  %v1191 = vunpack.c.h.b16 %v173
  %v1192 = vunpack.c.l.b16 %v174
  %v1193 = vunpack.c.h.b16 %v174
  %v1194 = vunpack.c.l.b16 %v175
  %v1195 = vunpack.c.h.b16 %v175
  %v1196 = vunpack.c.l.b16 %v176
  %v1197 = vunpack.c.h.b16 %v176
  %v1198 = vunpack.c.l.b16 %v177
  %v1199 = vunpack.c.h.b16 %v177
  %v1200 = vunpack.c.l.b16 %v178
  %v1201 = vunpack.c.h.b16 %v178
  %v1202 = vunpack.c.l.b16 %v179
  %v1203 = vunpack.c.h.b16 %v179
  %v1204 = vunpack.c.l.b16 %v180
  %v1205 = vunpack.c.h.b16 %v180
  %v1206 = vunpack.c.l.b16 %v181
  %v1207 = vunpack.c.h.b16 %v181
  %v1208 = vunpack.c.l.b16 %v182
  %v1209 = vunpack.c.h.b16 %v182
  %v1210 = vunpack.c.l.b16 %v183
  %v1211 = vunpack.c.h.b16 %v183
  %v1212 = vunpack.c.l.b16 %v184
  %v1213 = vunpack.c.h.b16 %v184
  %v1214 = vunpack.c.l.b16 %v185
  %v1215 = vunpack.c.h.b16 %v185
  %v1216 = vunpack.c.l.b16 %v186
  %v1217 = vunpack.c.h.b16 %v186
  %v1218 = vunpack.c.l.b16 %v187
  %v1219 = vunpack.c.h.b16 %v187
  %v1220 = vunpack.c.l.b16 %v188
  %v1221 = vunpack.c.h.b16 %v188
  %v1222 = vunpack.c.l.b16 %v189
  %v1223 = vunpack.c.h.b16 %v189
  %v1224 = vunpack.c.l.b16 %v190
  %v1225 = vunpack.c.h.b16 %v190
  %v1226 = vunpack.c.l.b16 %v191
  %v1227 = vunpack.c.h.b16 %v191
  %v1228 = vunpack.c.l.b16 %v192
  %v1229 = vunpack.c.h.b16 %v192
  %v1230 = vunpack.c.l.b16 %v193
  %v1231 = vunpack.c.h.b16 %v193
  %v1232 = vunpack.c.l.b16 %v194
  %v1233 = vunpack.c.h.b16 %v194
  %v1234 = vunpack.c.l.b16 %v195
  %v1235 = vunpack.c.h.b16 %v195
  %v1236 = vunpack.c.l.b16 %v196
  %v1237 = vunpack.c.h.b16 %v196
  %v1238 = vunpack.c.l.b16 %v197
  %v1239 = vunpack.c.h.b16 %v197
  %v1240 = vunpack.c.l.b16 %v198
  %v1241 = vunpack.c.h.b16 %v198
  %v1242 = vunpack.c.l.b16 %v199
  %v1243 = vunpack.c.h.b16 %v199
  %v1244 = vunpack.c.l.b16 %v200
  %v1245 = vunpack.c.h.b16 %v200
  %v1246 = vunpack.c.l.b16 %v201
  %v1247 = vunpack.c.h.b16 %v201
  %v1248 = vunpack.c.l.b16 %v202
  %v1249 = vunpack.c.h.b16 %v202
  %v1250 = vunpack.c.l.b16 %v203
  %v1251 = vunpack.c.h.b16 %v203
  %v1252 = vunpack.c.l.b16 %v204
  %v1253 = vunpack.c.h.b16 %v204
  %v1254 = vunpack.c.l.b16 %v205
  %v1255 = vunpack.c.h.b16 %v205
  %v1256 = vunpack.c.l.b16 %v206
  %v1257 = vunpack.c.h.b16 %v206
  %v1258 = vunpack.c.l.b16 %v207
  %v1259 = vunpack.c.h.b16 %v207
  %v1260 = vunpack.c.l.b16 %v208
  %v1261 = vunpack.c.h.b16 %v208
  %v1262 = vunpack.c.l.b16 %v209
  %v1263 = vunpack.c.h.b16 %v209
  %v1264 = vunpack.c.l.b16 %v210
  %v1265 = vunpack.c.h.b16 %v210
  %v1266 = vunpack.c.l.b16 %v211
  %v1267 = vunpack.c.h.b16 %v211
  %v1268 = vunpack.c.l.b16 %v212
  %v1269 = vunpack.c.h.b16 %v212
  %v1270 = vunpack.c.l.b16 %v213
  %v1271 = vunpack.c.h.b16 %v213
  %v1272 = vunpack.c.l.b16 %v214
  %v1273 = vunpack.c.h.b16 %v214
  %v1274 = vunpack.c.l.b16 %v215
  %v1275 = vunpack.c.h.b16 %v215
  %v1276 = vunpack.c.l.b16 %v216
  %v1277 = vunpack.c.h.b16 %v216
  %v1278 = vunpack.c.l.b16 %v217
  %v1279 = vunpack.c.h.b16 %v217
  %v1280 = vunpack.c.l.b16 %v218
  %v1281 = vunpack.c.h.b16 %v218
  %v1282 = vunpack.c.l.b16 %v219
  %v1283 = vunpack.c.h.b16 %v219
  %v1284 = vunpack.c.l.b16 %v220
  %v1285 = vunpack.c.h.b16 %v220
  %v1286 = vunpack.c.l.b16 %v221
  %v1287 = vunpack.c.h.b16 %v221
  %v1288 = vunpack.c.l.b16 %v222
  %v1289 = vunpack.c.h.b16 %v222
  %v1290 = vunpack.c.l.b16 %v223
  %v1291 = vunpack.c.h.b16 %v223
  %v1292 = vunpack.c.l.b16 %v224
  %v1293 = vunpack.c.h.b16 %v224
  %v1294 = vunpack.c.l.b16 %v225
  %v1295 = vunpack.c.h.b16 %v225
  %v1296 = vunpack.c.l.b16 %v226
  %v1297 = vunpack.c.h.b16 %v226
  %v1298 = vunpack.c.l.b16 %v227
  %v1299 = vunpack.c.h.b16 %v227
  %v1300 = vunpack.c.l.b16 %v228
  %v1301 = vunpack.c.h.b16 %v228
  %v1302 = vunpack.c.l.b16 %v229
  %v1303 = vunpack.c.h.b16 %v229
  %v1304 = vunpack.c.l.b16 %v230
  %v1305 = vunpack.c.h.b16 %v230
  %v1306 = vunpack.c.l.b16 %v231
  %v1307 = vunpack.c.h.b16 %v231
  %v1308 = vunpack.c.l.b16 %v232
  %v1309 = vunpack.c.h.b16 %v232
  %v1310 = vunpack.c.l.b16 %v233
  %v1311 = vunpack.c.h.b16 %v233
  %v1312 = vunpack.c.l.b16 %v234
  %v1313 = vunpack.c.h.b16 %v234
  %v1314 = vunpack.c.l.b16 %v235
  %v1315 = vunpack.c.h.b16 %v235
  %v1316 = vunpack.c.l.b16 %v236
  %v1317 = vunpack.c.h.b16 %v236
  %v1318 = vunpack.c.l.b16 %v237
  %v1319 = vunpack.c.h.b16 %v237
  %v1320 = vunpack.c.l.b16 %v238
  %v1321 = vunpack.c.h.b16 %v238
  %v1322 = vunpack.c.l.b16 %v239
  %v1323 = vunpack.c.h.b16 %v239
  %v1324 = vunpack.c.l.b16 %v240
  %v1325 = vunpack.c.h.b16 %v240
  %v1326 = vunpack.c.l.b16 %v241
  %v1327 = vunpack.c.h.b16 %v241
  %v1328 = vunpack.c.l.b16 %v242
  %v1329 = vunpack.c.h.b16 %v242
  %v1330 = vunpack.c.l.b16 %v243
  %v1331 = vunpack.c.h.b16 %v243
  %v1332 = vunpack.c.l.b16 %v244
  %v1333 = vunpack.c.h.b16 %v244
  %v1334 = vunpack.c.l.b16 %v245
  %v1335 = vunpack.c.h.b16 %v245
  %v1336 = vunpack.c.l.b16 %v246
  %v1337 = vunpack.c.h.b16 %v246
  %v1338 = vunpack.c.l.b16 %v247
  %v1339 = vunpack.c.h.b16 %v247
  %v1340 = vunpack.c.l.b16 %v248
  %v1341 = vunpack.c.h.b16 %v248
  %v1342 = vunpack.c.l.b16 %v249
  %v1343 = vunpack.c.h.b16 %v249
  %v1344 = vunpack.c.l.b16 %v250
  %v1345 = vunpack.c.h.b16 %v250
  %v1346 = vunpack.c.l.b16 %v251
  %v1347 = vunpack.c.h.b16 %v251
  %v1348 = vunpack.c.l.b16 %v252
  %v1349 = vunpack.c.h.b16 %v252
  %v1350 = vunpack.c.l.b16 %v253
  %v1351 = vunpack.c.h.b16 %v253
  %v1352 = vunpack.c.l.b16 %v254
  %v1353 = vunpack.c.h.b16 %v254
  %v1354 = vunpack.c.l.b16 %v255
  %v1355 = vunpack.c.h.b16 %v255
  %v1356 = vunpack.c.l.b16 %v256
  %v1357 = vunpack.c.h.b16 %v256
  %v1358 = vunpack.c.l.b16 %v257
  %v1359 = vunpack.c.h.b16 %v257
  %v1360 = vunpack.c.l.b16 %v258
  %v1361 = vunpack.c.h.b16 %v258
  %v1362 = vunpack.c.l.b16 %v259
  %v1363 = vunpack.c.h.b16 %v259
  %v1364 = vunpack.c.l.b16 %v260
  %v1365 = vunpack.c.h.b16 %v260
  %v1366 = vunpack.c.l.b16 %v261
  %v1367 = vunpack.c.h.b16 %v261
  %v1368 = vunpack.c.l.b16 %v262
  %v1369 = vunpack.c.h.b16 %v262
  %v1370 = vunpack.c.l.b16 %v263
  %v1371 = vunpack.c.h.b16 %v263
  %v1372 = vunpack.c.l.b16 %v264
  %v1373 = vunpack.c.h.b16 %v264
  %v1374 = vunpack.c.l.b16 %v265
  %v1375 = vunpack.c.h.b16 %v265
  %v1376 = vunpack.c.l.b16 %v266
  %v1377 = vunpack.c.h.b16 %v266
  %v1378 = vunpack.c.l.b16 %v267
  %v1379 = vunpack.c.h.b16 %v267
  %v1380 = vunpack.c.l.b16 %v268
  %v1381 = vunpack.c.h.b16 %v268
  %v1382 = vunpack.c.l.b16 %v269
  %v1383 = vunpack.c.h.b16 %v269
  %v1384 = vunpack.c.l.b16 %v270
  %v1385 = vunpack.c.h.b16 %v270
  %v1386 = vunpack.c.l.b16 %v271
  %v1387 = vunpack.c.h.b16 %v271
  %v1388 = vunpack.c.l.b16 %v272
  %v1389 = vunpack.c.h.b16 %v272
  %v1390 = vunpack.c.l.b16 %v273
  %v1391 = vunpack.c.h.b16 %v273
  %v1392 = vunpack.c.l.b16 %v274
  %v1393 = vunpack.c.h.b16 %v274
  %v1394 = vunpack.c.l.b16 %v275
  %v1395 = vunpack.c.h.b16 %v275
  %v1396 = vunpack.c.l.b16 %v276
  %v1397 = vunpack.c.h.b16 %v276
  %v1398 = vunpack.c.l.b16 %v277
  %v1399 = vunpack.c.h.b16 %v277
  %v1400 = vunpack.c.l.b16 %v278
  %v1401 = vunpack.c.h.b16 %v278
  %v1402 = vunpack.c.l.b16 %v279
  %v1403 = vunpack.c.h.b16 %v279
  %v1404 = vunpack.c.l.b16 %v280
  %v1405 = vunpack.c.h.b16 %v280
  %v1406 = vunpack.c.l.b16 %v281
  %v1407 = vunpack.c.h.b16 %v281
  %v1408 = vunpack.c.l.b16 %v282
  %v1409 = vunpack.c.h.b16 %v282
  %v1410 = vunpack.c.l.b16 %v283
  %v1411 = vunpack.c.h.b16 %v283
  %v1412 = vunpack.c.l.b16 %v284
  %v1413 = vunpack.c.h.b16 %v284
  %v1414 = vunpack.c.l.b16 %v285
  %v1415 = vunpack.c.h.b16 %v285
  %v1416 = vunpack.c.l.b16 %v286
  %v1417 = vunpack.c.h.b16 %v286
  %v1418 = vunpack.c.l.b16 %v287
  %v1419 = vunpack.c.h.b16 %v287
  %v1420 = vunpack.c.l.b16 %v288
  %v1421 = vunpack.c.h.b16 %v288
  %v1422 = vunpack.c.l.b16 %v289
  %v1423 = vunpack.c.h.b16 %v289
  %v1424 = vunpack.c.l.b16 %v290
  %v1425 = vunpack.c.h.b16 %v290
  %v1426 = vunpack.c.l.b16 %v291
  %v1427 = vunpack.c.h.b16 %v291
  %v1428 = vunpack.c.l.b16 %v292
  %v1429 = vunpack.c.h.b16 %v292
  %v1430 = vunpack.c.l.b16 %v293
  %v1431 = vunpack.c.h.b16 %v293
  %v1432 = vunpack.c.l.b16 %v294
  %v1433 = vunpack.c.h.b16 %v294
  %v1434 = vunpack.c.l.b16 %v295
  %v1435 = vunpack.c.h.b16 %v295
  %v1436 = vunpack.c.l.b16 %v296
  %v1437 = vunpack.c.h.b16 %v296
  %v1438 = vunpack.c.l.b16 %v297
  %v1439 = vunpack.c.h.b16 %v297
  %v1440 = vunpack.c.l.b16 %v298
  %v1441 = vunpack.c.h.b16 %v298
  %v1442 = vunpack.c.l.b16 %v299
  %v1443 = vunpack.c.h.b16 %v299
  %v1444 = vunpack.c.l.b16 %v300
  %v1445 = vunpack.c.h.b16 %v300
  %v1446 = vunpack.c.l.b16 %v301
  %v1447 = vunpack.c.h.b16 %v301
  %v1448 = vunpack.c.l.b16 %v302
  %v1449 = vunpack.c.h.b16 %v302
  %v1450 = vunpack.c.l.b16 %v303
  %v1451 = vunpack.c.h.b16 %v303
  %v1452 = vunpack.c.l.b16 %v304
  %v1453 = vunpack.c.h.b16 %v304
  %v1454 = vunpack.c.l.b16 %v305
  %v1455 = vunpack.c.h.b16 %v305
  %v1456 = vunpack.c.l.b16 %v306
  %v1457 = vunpack.c.h.b16 %v306
  %v1458 = vunpack.c.l.b16 %v307
  %v1459 = vunpack.c.h.b16 %v307
  %v1460 = vunpack.c.l.b16 %v308
  %v1461 = vunpack.c.h.b16 %v308
  %v1462 = vunpack.c.l.b16 %v309
  %v1463 = vunpack.c.h.b16 %v309
  %v1464 = vunpack.c.l.b16 %v310
  %v1465 = vunpack.c.h.b16 %v310
  %v1466 = vunpack.c.l.b16 %v311
  %v1467 = vunpack.c.h.b16 %v311
  %v1468 = vunpack.c.l.b16 %v312
  %v1469 = vunpack.c.h.b16 %v312
  %v1470 = vunpack.c.l.b16 %v313
  %v1471 = vunpack.c.h.b16 %v313
  %v1472 = vunpack.c.l.b16 %v314
  %v1473 = vunpack.c.h.b16 %v314
  %v1474 = vunpack.c.l.b16 %v315
  %v1475 = vunpack.c.h.b16 %v315
  %v1476 = vunpack.c.l.b16 %v316
  %v1477 = vunpack.c.h.b16 %v316
  %v1478 = vunpack.c.l.b16 %v317
  %v1479 = vunpack.c.h.b16 %v317
  %v1480 = vunpack.c.l.b16 %v318
  %v1481 = vunpack.c.h.b16 %v318
  %v1482 = vunpack.c.l.b16 %v319
  %v1483 = vunpack.c.h.b16 %v319
  %v1484 = vunpack.c.l.b16 %v320
  %v1485 = vunpack.c.h.b16 %v320
  %v1486 = vunpack.c.l.b16 %v321
  %v1487 = vunpack.c.h.b16 %v321
  %v1488 = vunpack.c.l.b16 %v322
  %v1489 = vunpack.c.h.b16 %v322
  %v1490 = vunpack.c.l.b16 %v323
  %v1491 = vunpack.c.h.b16 %v323
  %v1492 = vunpack.c.l.b16 %v324
  %v1493 = vunpack.c.h.b16 %v324
  %v1494 = vunpack.c.l.b16 %v325
  %v1495 = vunpack.c.h.b16 %v325
  %v1496 = vunpack.c.l.b16 %v326
  %v1497 = vunpack.c.h.b16 %v326
  %v1498 = vunpack.c.l.b16 %v327
  %v1499 = vunpack.c.h.b16 %v327
  %v1500 = vunpack.c.l.b16 %v328
  %v1501 = vunpack.c.h.b16 %v328
  %v1502 = vunpack.c.l.b16 %v329
  %v1503 = vunpack.c.h.b16 %v329
  %v1504 = vunpack.c.l.b16 %v330
  %v1505 = vunpack.c.h.b16 %v330
  %v1506 = vunpack.c.l.b16 %v331
  %v1507 = vunpack.c.h.b16 %v331
  %v1508 = vunpack.c.l.b16 %v332
  %v1509 = vunpack.c.h.b16 %v332
  %v1510 = vunpack.c.l.b16 %v333
  %v1511 = vunpack.c.h.b16 %v333
  %v1512 = vunpack.c.l.b16 %v334
  %v1513 = vunpack.c.h.b16 %v334
  %v1514 = vunpack.c.l.b16 %v335
  %v1515 = vunpack.c.h.b16 %v335
  %v1516 = vunpack.c.l.b16 %v336
  %v1517 = vunpack.c.h.b16 %v336
  %v1518 = vunpack.c.l.b16 %v337
  %v1519 = vunpack.c.h.b16 %v337
  %v1520 = vunpack.c.l.b16 %v338
  %v1521 = vunpack.c.h.b16 %v338
  %v1522 = vunpack.c.l.b16 %v339
  %v1523 = vunpack.c.h.b16 %v339
  %v1524 = vunpack.c.l.b16 %v340
  %v1525 = vunpack.c.h.b16 %v340
  %v1526 = vunpack.c.l.b16 %v341
  %v1527 = vunpack.c.h.b16 %v341
  %v1528 = vunpack.c.l.b16 %v342
  %v1529 = vunpack.c.h.b16 %v342
  %v1530 = vunpack.c.l.b16 %v343
  %v1531 = vunpack.c.h.b16 %v343
  %v1532 = vunpack.c.l.b16 %v344
  %v1533 = vunpack.c.h.b16 %v344
  %v1534 = vunpack.c.l.b16 %v345
  %v1535 = vunpack.c.h.b16 %v345
  %v1536 = vunpack.c.l.b16 %v346
  %v1537 = vunpack.c.h.b16 %v346
  %v1538 = vunpack.c.l.b16 %v347
  %v1539 = vunpack.c.h.b16 %v347
  %v1540 = vunpack.c.l.b16 %v348
  %v1541 = vunpack.c.h.b16 %v348
  %v1542 = vunpack.c.l.b16 %v349
  %v1543 = vunpack.c.h.b16 %v349
  %v1544 = vunpack.c.l.b16 %v350
  %v1545 = vunpack.c.h.b16 %v350
  %v1546 = vunpack.c.l.b16 %v351
  %v1547 = vunpack.c.h.b16 %v351
  %v1548 = vunpack.c.l.b16 %v352
  %v1549 = vunpack.c.h.b16 %v352
  %v1550 = vunpack.c.l.b16 %v353
  %v1551 = vunpack.c.h.b16 %v353
  %v1552 = vunpack.c.l.b16 %v354
  %v1553 = vunpack.c.h.b16 %v354
  %v1554 = vunpack.c.l.b16 %v355
  %v1555 = vunpack.c.h.b16 %v355
  %v1556 = vunpack.c.l.b16 %v356
  %v1557 = vunpack.c.h.b16 %v356
  %v1558 = vunpack.c.l.b16 %v357
  %v1559 = vunpack.c.h.b16 %v357
  %v1560 = vunpack.c.l.b16 %v358
  %v1561 = vunpack.c.h.b16 %v358
  %v1562 = vunpack.c.l.b16 %v359
  %v1563 = vunpack.c.h.b16 %v359
  %v1564 = vunpack.c.l.b16 %v360
  %v1565 = vunpack.c.h.b16 %v360
  %v1566 = vunpack.c.l.b16 %v361
  %v1567 = vunpack.c.h.b16 %v361
  %v1568 = vunpack.c.l.b16 %v362
  %v1569 = vunpack.c.h.b16 %v362
  %v1570 = vunpack.c.l.b16 %v363
  %v1571 = vunpack.c.h.b16 %v363
  %v1572 = vunpack.c.l.b16 %v364
  %v1573 = vunpack.c.h.b16 %v364
  %v1574 = vunpack.c.l.b16 %v365
  %v1575 = vunpack.c.h.b16 %v365
  %v1576 = vunpack.c.l.b16 %v366
  %v1577 = vunpack.c.h.b16 %v366
  %v1578 = vunpack.c.l.b16 %v367
  %v1579 = vunpack.c.h.b16 %v367
  %v1580 = vunpack.c.l.b16 %v368
  %v1581 = vunpack.c.h.b16 %v368
  %v1582 = vunpack.c.l.b16 %v369
  %v1583 = vunpack.c.h.b16 %v369
  %v1584 = vunpack.c.l.b16 %v370
  %v1585 = vunpack.c.h.b16 %v370
  %v1586 = vunpack.c.l.b16 %v371
  %v1587 = vunpack.c.h.b16 %v371
  %v1588 = vunpack.c.l.b16 %v372
  %v1589 = vunpack.c.h.b16 %v372
  %v1590 = vunpack.c.l.b16 %v373
  %v1591 = vunpack.c.h.b16 %v373
  %v1592 = vunpack.c.l.b16 %v374
  %v1593 = vunpack.c.h.b16 %v374
  %v1594 = vunpack.c.l.b16 %v375
  %v1595 = vunpack.c.h.b16 %v375
  %v1596 = vunpack.c.l.b16 %v376
  %v1597 = vunpack.c.h.b16 %v376
  %v1598 = vunpack.c.l.b16 %v377
  %v1599 = vunpack.c.h.b16 %v377
  %v1600 = vunpack.c.l.b16 %v378
  %v1601 = vunpack.c.h.b16 %v378
  %v1602 = vunpack.c.l.b16 %v379
  %v1603 = vunpack.c.h.b16 %v379
  %v1604 = vunpack.c.l.b16 %v380
  %v1605 = vunpack.c.h.b16 %v380
  %v1606 = vunpack.c.l.b16 %v381
  %v1607 = vunpack.c.h.b16 %v381
  %v1608 = vunpack.c.l.b16 %v382
  %v1609 = vunpack.c.h.b16 %v382
  %v1610 = vunpack.c.l.b16 %v383
  %v1611 = vunpack.c.h.b16 %v383
  %v1612 = vunpack.c.l.b16 %v384
  %v1613 = vunpack.c.h.b16 %v384
  %v1614 = vunpack.c.l.b16 %v385
  %v1615 = vunpack.c.h.b16 %v385
  %v1616 = vunpack.c.l.b16 %v386
  %v1617 = vunpack.c.h.b16 %v386
  %v1618 = vunpack.c.l.b16 %v387
  %v1619 = vunpack.c.h.b16 %v387
  %v1620 = vunpack.c.l.b16 %v388
  %v1621 = vunpack.c.h.b16 %v388
  %v1622 = vunpack.c.l.b16 %v389
  %v1623 = vunpack.c.h.b16 %v389
  %v1624 = vunpack.c.l.b16 %v390
  %v1625 = vunpack.c.h.b16 %v390
  %v1626 = vunpack.c.l.b16 %v391
  %v1627 = vunpack.c.h.b16 %v391
  %v1628 = vunpack.c.l.b16 %v392
  %v1629 = vunpack.c.h.b16 %v392
  %v1630 = vunpack.c.l.b16 %v393
  %v1631 = vunpack.c.h.b16 %v393
  %v1632 = vunpack.c.l.b16 %v394
  %v1633 = vunpack.c.h.b16 %v394
  %v1634 = vunpack.c.l.b16 %v395
  %v1635 = vunpack.c.h.b16 %v395
  %v1636 = vunpack.c.l.b16 %v396
  %v1637 = vunpack.c.h.b16 %v396
  %v1638 = vunpack.c.l.b16 %v397
  %v1639 = vunpack.c.h.b16 %v397
  %v1640 = vunpack.c.l.b16 %v398
  %v1641 = vunpack.c.h.b16 %v398
  %v1642 = vunpack.c.l.b16 %v399
  %v1643 = vunpack.c.h.b16 %v399
  %v1644 = vunpack.c.l.b16 %v400
  %v1645 = vunpack.c.h.b16 %v400
  %v1646 = vunpack.c.l.b16 %v401
  %v1647 = vunpack.c.h.b16 %v401
  %v1648 = vunpack.c.l.b16 %v402
  %v1649 = vunpack.c.h.b16 %v402
  %v1650 = vunpack.c.l.b16 %v403
  %v1651 = vunpack.c.h.b16 %v403
  %v1652 = vunpack.c.l.b16 %v404
  %v1653 = vunpack.c.h.b16 %v404
  %v1654 = vunpack.c.l.b16 %v405
  %v1655 = vunpack.c.h.b16 %v405
  %v1656 = vunpack.c.l.b16 %v406
  %v1657 = vunpack.c.h.b16 %v406
  %v1658 = vunpack.c.l.b16 %v407
  %v1659 = vunpack.c.h.b16 %v407
  %v1660 = vunpack.c.l.b16 %v408
  %v1661 = vunpack.c.h.b16 %v408
  %v1662 = vunpack.c.l.b16 %v409
  %v1663 = vunpack.c.h.b16 %v409
  %v1664 = vunpack.c.l.b16 %v410
  %v1665 = vunpack.c.h.b16 %v410
  %v1666 = vunpack.c.l.b16 %v411
  %v1667 = vunpack.c.h.b16 %v411
  %v1668 = vunpack.c.l.b16 %v412
  %v1669 = vunpack.c.h.b16 %v412
  %v1670 = vunpack.c.l.b16 %v413
  %v1671 = vunpack.c.h.b16 %v413
  %v1672 = vunpack.c.l.b16 %v414
  %v1673 = vunpack.c.h.b16 %v414
  %v1674 = vunpack.c.l.b16 %v415
  %v1675 = vunpack.c.h.b16 %v415
  %v1676 = vunpack.c.l.b16 %v416
  %v1677 = vunpack.c.h.b16 %v416
  %v1678 = vunpack.c.l.b16 %v417
  %v1679 = vunpack.c.h.b16 %v417
  %v1680 = vunpack.c.l.b16 %v418
  %v1681 = vunpack.c.h.b16 %v418
  %v1682 = vunpack.c.l.b16 %v419
  %v1683 = vunpack.c.h.b16 %v419
  %v1684 = vunpack.c.l.b16 %v420
  %v1685 = vunpack.c.h.b16 %v420
  %v1686 = vunpack.c.l.b16 %v421
  %v1687 = vunpack.c.h.b16 %v421
  %v1688 = vunpack.c.l.b16 %v422
  %v1689 = vunpack.c.h.b16 %v422
  %v1690 = vunpack.c.l.b16 %v423
  %v1691 = vunpack.c.h.b16 %v423
  %v1692 = vunpack.c.l.b16 %v424
  %v1693 = vunpack.c.h.b16 %v424
  %v1694 = vunpack.c.l.b16 %v425
  %v1695 = vunpack.c.h.b16 %v425
  %v1696 = vunpack.c.l.b16 %v426
  %v1697 = vunpack.c.h.b16 %v426
  %v1698 = vunpack.c.l.b16 %v427
  %v1699 = vunpack.c.h.b16 %v427
  %v1700 = vunpack.c.l.b16 %v428
  %v1701 = vunpack.c.h.b16 %v428
  %v1702 = vunpack.c.l.b16 %v429
  %v1703 = vunpack.c.h.b16 %v429
  %v1704 = vunpack.c.l.b16 %v430
  %v1705 = vunpack.c.h.b16 %v430
  %v1706 = vunpack.c.l.b16 %v431
  %v1707 = vunpack.c.h.b16 %v431
  %v1708 = vunpack.c.l.b16 %v432
  %v1709 = vunpack.c.h.b16 %v432
  %v1710 = vunpack.c.l.b16 %v433
  %v1711 = vunpack.c.h.b16 %v433
  %v1712 = vpack.c.b16 %v946, %v944
  %v1713 = vpack.c.b16 %v947, %v945
  %v1714 = vpack.c.b16 %v950, %v948
  %v1715 = vpack.c.b16 %v951, %v949
  %v1716 = vpack.c.b16 %v954, %v952
  %v1717 = vpack.c.b16 %v955, %v953
  %v1718 = vpack.c.b16 %v958, %v956
  %v1719 = vpack.c.b16 %v959, %v957
  %v1720 = vpack.c.b16 %v962, %v960
  %v1721 = vpack.c.b16 %v963, %v961
  %v1722 = vpack.c.b16 %v966, %v964
  %v1723 = vpack.c.b16 %v967, %v965
  %v1724 = vpack.c.b16 %v970, %v968
  %v1725 = vpack.c.b16 %v971, %v969
  %v1726 = vpack.c.b16 %v974, %v972
  %v1727 = vpack.c.b16 %v975, %v973
  %v1728 = vpack.c.b16 %v978, %v976
  %v1729 = vpack.c.b16 %v979, %v977
  %v1730 = vpack.c.b16 %v982, %v980
  %v1731 = vpack.c.b16 %v983, %v981
  %v1732 = vpack.c.b16 %v986, %v984
  %v1733 = vpack.c.b16 %v987, %v985
  %v1734 = vpack.c.b16 %v990, %v988
  %v1735 = vpack.c.b16 %v991, %v989
  %v1736 = vpack.c.b16 %v994, %v992
  %v1737 = vpack.c.b16 %v995, %v993
  %v1738 = vpack.c.b16 %v998, %v996
  %v1739 = vpack.c.b16 %v999, %v997
  %v1740 = vpack.c.b16 %v1002, %v1000
  %v1741 = vpack.c.b16 %v1003, %v1001
  %v1742 = vpack.c.b16 %v1006, %v1004
  %v1743 = vpack.c.b16 %v1007, %v1005
  %v1744 = vpack.c.b16 %v1010, %v1008
  %v1745 = vpack.c.b16 %v1011, %v1009
  %v1746 = vpack.c.b16 %v1014, %v1012
  %v1747 = vpack.c.b16 %v1015, %v1013
  %v1748 = vpack.c.b16 %v1018, %v1016
  %v1749 = vpack.c.b16 %v1019, %v1017
  %v1750 = vpack.c.b16 %v1022, %v1020
  %v1751 = vpack.c.b16 %v1023, %v1021
  %v1752 = vpack.c.b16 %v1026, %v1024
  %v1753 = vpack.c.b16 %v1027, %v1025
  %v1754 = vpack.c.b16 %v1030, %v1028
  %v1755 = vpack.c.b16 %v1031, %v1029
  %v1756 = vpack.c.b16 %v1034, %v1032
  %v1757 = vpack.c.b16 %v1035, %v1033
  %v1758 = vpack.c.b16 %v1038, %v1036
  %v1759 = vpack.c.b16 %v1039, %v1037
  %v1760 = vpack.c.b16 %v1042, %v1040
  %v1761 = vpack.c.b16 %v1043, %v1041
  %v1762 = vpack.c.b16 %v1046, %v1044
  %v1763 = vpack.c.b16 %v1047, %v1045
  %v1764 = vpack.c.b16 %v1050, %v1048
  %v1765 = vpack.c.b16 %v1051, %v1049
  %v1766 = vpack.c.b16 %v1054, %v1052
  %v1767 = vpack.c.b16 %v1055, %v1053
  %v1768 = vpack.c.b16 %v1058, %v1056
  %v1769 = vpack.c.b16 %v1059, %v1057
  %v1770 = vpack.c.b16 %v1062, %v1060
  %v1771 = vpack.c.b16 %v1063, %v1061
  %v1772 = vpack.c.b16 %v1066, %v1064
  %v1773 = vpack.c.b16 %v1067, %v1065
  %v1774 = vpack.c.b16 %v1070, %v1068
  %v1775 = vpack.c.b16 %v1071, %v1069
  %v1776 = vpack.c.b16 %v1074, %v1072
  %v1777 = vpack.c.b16 %v1075, %v1073
  %v1778 = vpack.c.b16 %v1078, %v1076
  %v1779 = vpack.c.b16 %v1079, %v1077
  %v1780 = vpack.c.b16 %v1082, %v1080
  %v1781 = vpack.c.b16 %v1083, %v1081
  %v1782 = vpack.c.b16 %v1086, %v1084
  %v1783 = vpack.c.b16 %v1087, %v1085
  %v1784 = vpack.c.b16 %v1090, %v1088
  %v1785 = vpack.c.b16 %v1091, %v1089
  %v1786 = vpack.c.b16 %v1094, %v1092
  %v1787 = vpack.c.b16 %v1095, %v1093
  %v1788 = vpack.c.b16 %v1098, %v1096
  %v1789 = vpack.c.b16 %v1099, %v1097
  %v1790 = vpack.c.b16 %v1102, %v1100
  %v1791 = vpack.c.b16 %v1103, %v1101
  %v1792 = vpack.c.b16 %v1106, %v1104
  %v1793 = vpack.c.b16 %v1107, %v1105
  %v1794 = vpack.c.b16 %v1110, %v1108
  %v1795 = vpack.c.b16 %v1111, %v1109
  %v1796 = vpack.c.b16 %v1114, %v1112
  %v1797 = vpack.c.b16 %v1115, %v1113
  %v1798 = vpack.c.b16 %v1118, %v1116
  %v1799 = vpack.c.b16 %v1119, %v1117
  %v1800 = vpack.c.b16 %v1122, %v1120
  %v1801 = vpack.c.b16 %v1123, %v1121
  %v1802 = vpack.c.b16 %v1126, %v1124
  %v1803 = vpack.c.b16 %v1127, %v1125
  %v1804 = vpack.c.b16 %v1130, %v1128
  %v1805 = vpack.c.b16 %v1131, %v1129
  %v1806 = vpack.c.b16 %v1134, %v1132
  %v1807 = vpack.c.b16 %v1135, %v1133
  %v1808 = vpack.c.b16 %v1138, %v1136
  %v1809 = vpack.c.b16 %v1139, %v1137
  %v1810 = vpack.c.b16 %v1142, %v1140
  %v1811 = vpack.c.b16 %v1143, %v1141
  %v1812 = vpack.c.b16 %v1146, %v1144
  %v1813 = vpack.c.b16 %v1147, %v1145
  %v1814 = vpack.c.b16 %v1150, %v1148
  %v1815 = vpack.c.b16 %v1151, %v1149
  %v1816 = vpack.c.b16 %v1154, %v1152
  %v1817 = vpack.c.b16 %v1155, %v1153
  %v1818 = vpack.c.b16 %v1158, %v1156
  %v1819 = vpack.c.b16 %v1159, %v1157
  %v1820 = vpack.c.b16 %v1162, %v1160
  %v1821 = vpack.c.b16 %v1163, %v1161
  %v1822 = vpack.c.b16 %v1166, %v1164
  %v1823 = vpack.c.b16 %v1167, %v1165
  %v1824 = vpack.c.b16 %v1170, %v1168
  %v1825 = vpack.c.b16 %v1171, %v1169
  %v1826 = vpack.c.b16 %v1174, %v1172
  %v1827 = vpack.c.b16 %v1175, %v1173
  %v1828 = vpack.c.b16 %v1178, %v1176
  %v1829 = vpack.c.b16 %v1179, %v1177
  %v1830 = vpack.c.b16 %v1182, %v1180
  %v1831 = vpack.c.b16 %v1183, %v1181
  %v1832 = vpack.c.b16 %v1186, %v1184
  %v1833 = vpack.c.b16 %v1187, %v1185
  %v1834 = vpack.c.b16 %v1190, %v1188
  %v1835 = vpack.c.b16 %v1191, %v1189
  %v1836 = vpack.c.b16 %v1194, %v1192
  %v1837 = vpack.c.b16 %v1195, %v1193
  %v1838 = vpack.c.b16 %v1198, %v1196
  %v1839 = vpack.c.b16 %v1199, %v1197
  %v1840 = vpack.c.b16 %v1202, %v1200
  %v1841 = vpack.c.b16 %v1203, %v1201
  %v1842 = vpack.c.b16 %v1206, %v1204
  %v1843 = vpack.c.b16 %v1207, %v1205
  %v1844 = vpack.c.b16 %v1210, %v1208
  %v1845 = vpack.c.b16 %v1211, %v1209
  %v1846 = vpack.c.b16 %v1214, %v1212
  %v1847 = vpack.c.b16 %v1215, %v1213
  %v1848 = vpack.c.b16 %v1218, %v1216
  %v1849 = vpack.c.b16 %v1219, %v1217
  %v1850 = vpack.c.b16 %v1222, %v1220
  %v1851 = vpack.c.b16 %v1223, %v1221
  %v1852 = vpack.c.b16 %v1226, %v1224
  %v1853 = vpack.c.b16 %v1227, %v1225
  %v1854 = vpack.c.b16 %v1230, %v1228
  %v1855 = vpack.c.b16 %v1231, %v1229
  %v1856 = vpack.c.b16 %v1234, %v1232
  %v1857 = vpack.c.b16 %v1235, %v1233
  %v1858 = vpack.c.b16 %v1238, %v1236
  %v1859 = vpack.c.b16 %v1239, %v1237
  %v1860 = vpack.c.b16 %v1242, %v1240
  %v1861 = vpack.c.b16 %v1243, %v1241
  %v1862 = vpack.c.b16 %v1246, %v1244
  %v1863 = vpack.c.b16 %v1247, %v1245
  %v1864 = vpack.c.b16 %v1250, %v1248
  %v1865 = vpack.c.b16 %v1251, %v1249
  %v1866 = vpack.c.b16 %v1254, %v1252
  %v1867 = vpack.c.b16 %v1255, %v1253
  %v1868 = vpack.c.b16 %v1258, %v1256
  %v1869 = vpack.c.b16 %v1259, %v1257
  %v1870 = vpack.c.b16 %v1262, %v1260
  %v1871 = vpack.c.b16 %v1263, %v1261
  %v1872 = vpack.c.b16 %v1266, %v1264
  %v1873 = vpack.c.b16 %v1267, %v1265
  %v1874 = vpack.c.b16 %v1270, %v1268
  %v1875 = vpack.c.b16 %v1271, %v1269
  %v1876 = vpack.c.b16 %v1274, %v1272
  %v1877 = vpack.c.b16 %v1275, %v1273
  %v1878 = vpack.c.b16 %v1278, %v1276
  %v1879 = vpack.c.b16 %v1279, %v1277
  %v1880 = vpack.c.b16 %v1282, %v1280
  %v1881 = vpack.c.b16 %v1283, %v1281
  %v1882 = vpack.c.b16 %v1286, %v1284
  %v1883 = vpack.c.b16 %v1287, %v1285
  %v1884 = vpack.c.b16 %v1290, %v1288
  %v1885 = vpack.c.b16 %v1291, %v1289
  %v1886 = vpack.c.b16 %v1294, %v1292
  %v1887 = vpack.c.b16 %v1295, %v1293
  %v1888 = vpack.c.b16 %v1298, %v1296
  %v1889 = vpack.c.b16 %v1299, %v1297
  %v1890 = vpack.c.b16 %v1302, %v1300
  %v1891 = vpack.c.b16 %v1303, %v1301
  %v1892 = vpack.c.b16 %v1306, %v1304
  %v1893 = vpack.c.b16 %v1307, %v1305
  %v1894 = vpack.c.b16 %v1310, %v1308
  %v1895 = vpack.c.b16 %v1311, %v1309
  %v1896 = vpack.c.b16 %v1314, %v1312
  %v1897 = vpack.c.b16 %v1315, %v1313
  %v1898 = vpack.c.b16 %v1318, %v1316
  %v1899 = vpack.c.b16 %v1319, %v1317
  %v1900 = vpack.c.b16 %v1322, %v1320
  %v1901 = vpack.c.b16 %v1323, %v1321
  %v1902 = vpack.c.b16 %v1326, %v1324
  %v1903 = vpack.c.b16 %v1327, %v1325
  %v1904 = vpack.c.b16 %v1330, %v1328
  %v1905 = vpack.c.b16 %v1331, %v1329
  %v1906 = vpack.c.b16 %v1334, %v1332
  %v1907 = vpack.c.b16 %v1335, %v1333
  %v1908 = vpack.c.b16 %v1338, %v1336
  %v1909 = vpack.c.b16 %v1339, %v1337
  %v1910 = vpack.c.b16 %v1342, %v1340
  %v1911 = vpack.c.b16 %v1343, %v1341
  %v1912 = vpack.c.b16 %v1346, %v1344
  %v1913 = vpack.c.b16 %v1347, %v1345
  %v1914 = vpack.c.b16 %v1350, %v1348
  %v1915 = vpack.c.b16 %v1351, %v1349
  %v1916 = vpack.c.b16 %v1354, %v1352
  %v1917 = vpack.c.b16 %v1355, %v1353
  %v1918 = vpack.c.b16 %v1358, %v1356
  %v1919 = vpack.c.b16 %v1359, %v1357
  %v1920 = vpack.c.b16 %v1362, %v1360
  %v1921 = vpack.c.b16 %v1363, %v1361
  %v1922 = vpack.c.b16 %v1366, %v1364
  %v1923 = vpack.c.b16 %v1367, %v1365
  %v1924 = vpack.c.b16 %v1370, %v1368
  %v1925 = vpack.c.b16 %v1371, %v1369
  %v1926 = vpack.c.b16 %v1374, %v1372
  %v1927 = vpack.c.b16 %v1375, %v1373
  %v1928 = vpack.c.b16 %v1378, %v1376
  %v1929 = vpack.c.b16 %v1379, %v1377
  %v1930 = vpack.c.b16 %v1382, %v1380
  %v1931 = vpack.c.b16 %v1383, %v1381
  %v1932 = vpack.c.b16 %v1386, %v1384
  %v1933 = vpack.c.b16 %v1387, %v1385
  %v1934 = vpack.c.b16 %v1390, %v1388
  %v1935 = vpack.c.b16 %v1391, %v1389
  %v1936 = vpack.c.b16 %v1394, %v1392
  %v1937 = vpack.c.b16 %v1395, %v1393
  %v1938 = vpack.c.b16 %v1398, %v1396
  %v1939 = vpack.c.b16 %v1399, %v1397
  %v1940 = vpack.c.b16 %v1402, %v1400
  %v1941 = vpack.c.b16 %v1403, %v1401
  %v1942 = vpack.c.b16 %v1406, %v1404
  %v1943 = vpack.c.b16 %v1407, %v1405
  %v1944 = vpack.c.b16 %v1410, %v1408
  %v1945 = vpack.c.b16 %v1411, %v1409
  %v1946 = vpack.c.b16 %v1414, %v1412
  %v1947 = vpack.c.b16 %v1415, %v1413
  %v1948 = vpack.c.b16 %v1418, %v1416
  %v1949 = vpack.c.b16 %v1419, %v1417
  %v1950 = vpack.c.b16 %v1422, %v1420
  %v1951 = vpack.c.b16 %v1423, %v1421
  %v1952 = vpack.c.b16 %v1426, %v1424
  %v1953 = vpack.c.b16 %v1427, %v1425
  %v1954 = vpack.c.b16 %v1430, %v1428
  %v1955 = vpack.c.b16 %v1431, %v1429
  %v1956 = vpack.c.b16 %v1434, %v1432
  %v1957 = vpack.c.b16 %v1435, %v1433
  %v1958 = vpack.c.b16 %v1438, %v1436
  %v1959 = vpack.c.b16 %v1439, %v1437
  %v1960 = vpack.c.b16 %v1442, %v1440
  %v1961 = vpack.c.b16 %v1443, %v1441
  %v1962 = vpack.c.b16 %v1446, %v1444
  %v1963 = vpack.c.b16 %v1447, %v1445
  %v1964 = vpack.c.b16 %v1450, %v1448
  %v1965 = vpack.c.b16 %v1451, %v1449
  %v1966 = vpack.c.b16 %v1454, %v1452
  %v1967 = vpack.c.b16 %v1455, %v1453
  %v1968 = vpack.c.b16 %v1458, %v1456
  %v1969 = vpack.c.b16 %v1459, %v1457
  %v1970 = vpack.c.b16 %v1462, %v1460
  %v1971 = vpack.c.b16 %v1463, %v1461
  %v1972 = vpack.c.b16 %v1466, %v1464
  %v1973 = vpack.c.b16 %v1467, %v1465
  %v1974 = vpack.c.b16 %v1470, %v1468
  %v1975 = vpack.c.b16 %v1471, %v1469
  %v1976 = vpack.c.b16 %v1474, %v1472
  %v1977 = vpack.c.b16 %v1475, %v1473
  %v1978 = vpack.c.b16 %v1478, %v1476
  %v1979 = vpack.c.b16 %v1479, %v1477
  %v1980 = vpack.c.b16 %v1482, %v1480
  %v1981 = vpack.c.b16 %v1483, %v1481
  %v1982 = vpack.c.b16 %v1486, %v1484
  %v1983 = vpack.c.b16 %v1487, %v1485
  %v1984 = vpack.c.b16 %v1490, %v1488
  %v1985 = vpack.c.b16 %v1491, %v1489
  %v1986 = vpack.c.b16 %v1494, %v1492
  %v1987 = vpack.c.b16 %v1495, %v1493
  %v1988 = vpack.c.b16 %v1498, %v1496
  %v1989 = vpack.c.b16 %v1499, %v1497
  %v1990 = vpack.c.b16 %v1502, %v1500
  %v1991 = vpack.c.b16 %v1503, %v1501
  %v1992 = vpack.c.b16 %v1506, %v1504
  %v1993 = vpack.c.b16 %v1507, %v1505
  %v1994 = vpack.c.b16 %v1510, %v1508
  %v1995 = vpack.c.b16 %v1511, %v1509
  %v1996 = vpack.c.b16 %v1514, %v1512
  %v1997 = vpack.c.b16 %v1515, %v1513
  %v1998 = vpack.c.b16 %v1518, %v1516
  %v1999 = vpack.c.b16 %v1519, %v1517
  %v2000 = vpack.c.b16 %v1522, %v1520
  %v2001 = vpack.c.b16 %v1523, %v1521
  %v2002 = vpack.c.b16 %v1526, %v1524
  %v2003 = vpack.c.b16 %v1527, %v1525
  %v2004 = vpack.c.b16 %v1530, %v1528
  %v2005 = vpack.c.b16 %v1531, %v1529
  %v2006 = vpack.c.b16 %v1534, %v1532
  %v2007 = vpack.c.b16 %v1535, %v1533
  %v2008 = vpack.c.b16 %v1538, %v1536
  %v2009 = vpack.c.b16 %v1539, %v1537
  %v2010 = vpack.c.b16 %v1542, %v1540
  %v2011 = vpack.c.b16 %v1543, %v1541
  %v2012 = vpack.c.b16 %v1546, %v1544
  %v2013 = vpack.c.b16 %v1547, %v1545
  %v2014 = vpack.c.b16 %v1550, %v1548
  %v2015 = vpack.c.b16 %v1551, %v1549
  %v2016 = vpack.c.b16 %v1554, %v1552
  %v2017 = vpack.c.b16 %v1555, %v1553
  %v2018 = vpack.c.b16 %v1558, %v1556
  %v2019 = vpack.c.b16 %v1559, %v1557
  %v2020 = vpack.c.b16 %v1562, %v1560
  %v2021 = vpack.c.b16 %v1563, %v1561
  %v2022 = vpack.c.b16 %v1566, %v1564
  %v2023 = vpack.c.b16 %v1567, %v1565
  %v2024 = vpack.c.b16 %v1570, %v1568
  %v2025 = vpack.c.b16 %v1571, %v1569
  %v2026 = vpack.c.b16 %v1574, %v1572
  %v2027 = vpack.c.b16 %v1575, %v1573
  %v2028 = vpack.c.b16 %v1578, %v1576
  %v2029 = vpack.c.b16 %v1579, %v1577
  %v2030 = vpack.c.b16 %v1582, %v1580
  %v2031 = vpack.c.b16 %v1583, %v1581
  %v2032 = vpack.c.b16 %v1586, %v1584
  %v2033 = vpack.c.b16 %v1587, %v1585
  %v2034 = vpack.c.b16 %v1590, %v1588
  %v2035 = vpack.c.b16 %v1591, %v1589
  %v2036 = vpack.c.b16 %v1594, %v1592
  %v2037 = vpack.c.b16 %v1595, %v1593
  %v2038 = vpack.c.b16 %v1598, %v1596
  %v2039 = vpack.c.b16 %v1599, %v1597
  %v2040 = vpack.c.b16 %v1602, %v1600
  %v2041 = vpack.c.b16 %v1603, %v1601
  %v2042 = vpack.c.b16 %v1606, %v1604
  %v2043 = vpack.c.b16 %v1607, %v1605
  %v2044 = vpack.c.b16 %v1610, %v1608
  %v2045 = vpack.c.b16 %v1611, %v1609
  %v2046 = vpack.c.b16 %v1614, %v1612
  %v2047 = vpack.c.b16 %v1615, %v1613
  %v2048 = vpack.c.b16 %v1618, %v1616
  %v2049 = vpack.c.b16 %v1619, %v1617
  %v2050 = vpack.c.b16 %v1622, %v1620
  %v2051 = vpack.c.b16 %v1623, %v1621
  %v2052 = vpack.c.b16 %v1626, %v1624
  %v2053 = vpack.c.b16 %v1627, %v1625
  %v2054 = vpack.c.b16 %v1630, %v1628
  %v2055 = vpack.c.b16 %v1631, %v1629
  %v2056 = vpack.c.b16 %v1634, %v1632
  %v2057 = vpack.c.b16 %v1635, %v1633
  %v2058 = vpack.c.b16 %v1638, %v1636
  %v2059 = vpack.c.b16 %v1639, %v1637
  %v2060 = vpack.c.b16 %v1642, %v1640
  %v2061 = vpack.c.b16 %v1643, %v1641
  %v2062 = vpack.c.b16 %v1646, %v1644
  %v2063 = vpack.c.b16 %v1647, %v1645
  %v2064 = vpack.c.b16 %v1650, %v1648
  %v2065 = vpack.c.b16 %v1651, %v1649
  %v2066 = vpack.c.b16 %v1654, %v1652
  %v2067 = vpack.c.b16 %v1655, %v1653
  %v2068 = vpack.c.b16 %v1658, %v1656
  %v2069 = vpack.c.b16 %v1659, %v1657
  %v2070 = vpack.c.b16 %v1662, %v1660
  %v2071 = vpack.c.b16 %v1663, %v1661
  %v2072 = vpack.c.b16 %v1666, %v1664
  %v2073 = vpack.c.b16 %v1667, %v1665
  %v2074 = vpack.c.b16 %v1670, %v1668
  %v2075 = vpack.c.b16 %v1671, %v1669
  %v2076 = vpack.c.b16 %v1674, %v1672
  %v2077 = vpack.c.b16 %v1675, %v1673
  %v2078 = vpack.c.b16 %v1678, %v1676
  %v2079 = vpack.c.b16 %v1679, %v1677
  %v2080 = vpack.c.b16 %v1682, %v1680
  %v2081 = vpack.c.b16 %v1683, %v1681
  %v2082 = vpack.c.b16 %v1686, %v1684
  %v2083 = vpack.c.b16 %v1687, %v1685
  %v2084 = vpack.c.b16 %v1690, %v1688
  %v2085 = vpack.c.b16 %v1691, %v1689
  %v2086 = vpack.c.b16 %v1694, %v1692
  %v2087 = vpack.c.b16 %v1695, %v1693
  %v2088 = vpack.c.b16 %v1698, %v1696
  %v2089 = vpack.c.b16 %v1699, %v1697
  %v2090 = vpack.c.b16 %v1702, %v1700
  %v2091 = vpack.c.b16 %v1703, %v1701
  %v2092 = vpack.c.b16 %v1706, %v1704
  %v2093 = vpack.c.b16 %v1707, %v1705
  %v2094 = vpack.c.b16 %v1710, %v1708
  %v2095 = vpack.c.b16 %v1711, %v1709
  %2480 = vmatpush.bf16.msra.mxu0 %v1726
  %2481 = vmatpush.bf16.msra.mxu0 %v1724
  %2482 = vmatpush.bf16.msra.mxu0 %v1722
  %2483 = vmatpush.bf16.msra.mxu0 %v1720
  %2484 = vmatpush.bf16.msra.mxu0 %v1718
  %2485 = vmatpush.bf16.msra.mxu0 %v1716
  %2486 = vmatpush.bf16.msra.mxu0 %v1714
  %2487 = vmatpush.bf16.msra.mxu0 %v1712
  %2488 = vmatmul.bf16.gmra.mxu0 %v512
  %v2489 = vpop.f32.mrf.mxu0
  %v2490 = vadd.f32 %v436, %v2489
  %v2491 = vpop.f32.mrf.mxu0
  %v2492 = vadd.f32 %v436, %v2491
  %2493 = vdwg.mxu0
  %2494 = vmatpush.bf16.msra.mxu0 %v1742
  %2495 = vmatpush.bf16.msra.mxu0 %v1740
  %2496 = vmatpush.bf16.msra.mxu0 %v1738
  %2497 = vmatpush.bf16.msra.mxu0 %v1736
  %2498 = vmatpush.bf16.msra.mxu0 %v1734
  %2499 = vmatpush.bf16.msra.mxu0 %v1732
  %2500 = vmatpush.bf16.msra.mxu0 %v1730
  %2501 = vmatpush.bf16.msra.mxu0 %v1728
  %2502 = vmatmul.bf16.gmra.mxu0 %v513
  %v2503 = vpop.f32.mrf.mxu0
  %v2504 = vadd.f32 %v2490, %v2503
  %v2505 = vpop.f32.mrf.mxu0
  %v2506 = vadd.f32 %v2492, %v2505
  %2507 = vdwg.mxu0
  %2508 = vmatpush.bf16.msra.mxu0 %v1758
  %2509 = vmatpush.bf16.msra.mxu0 %v1756
  %2510 = vmatpush.bf16.msra.mxu0 %v1754
  %2511 = vmatpush.bf16.msra.mxu0 %v1752
  %2512 = vmatpush.bf16.msra.mxu0 %v1750
  %2513 = vmatpush.bf16.msra.mxu0 %v1748
  %2514 = vmatpush.bf16.msra.mxu0 %v1746
  %2515 = vmatpush.bf16.msra.mxu0 %v1744
  %2516 = vmatmul.bf16.gmra.mxu0 %v514
  %v2517 = vpop.f32.mrf.mxu0
  %v2518 = vadd.f32 %v2504, %v2517
  %v2519 = vpop.f32.mrf.mxu0
  %v2520 = vadd.f32 %v2506, %v2519
  %2521 = vdwg.mxu0
  %2522 = vmatpush.bf16.msra.mxu0 %v1774
  %2523 = vmatpush.bf16.msra.mxu0 %v1772
  %2524 = vmatpush.bf16.msra.mxu0 %v1770
  %2525 = vmatpush.bf16.msra.mxu0 %v1768
  %2526 = vmatpush.bf16.msra.mxu0 %v1766
  %2527 = vmatpush.bf16.msra.mxu0 %v1764
  %2528 = vmatpush.bf16.msra.mxu0 %v1762
  %2529 = vmatpush.bf16.msra.mxu0 %v1760
  %2530 = vmatmul.bf16.gmra.mxu0 %v515
  %v2531 = vpop.f32.mrf.mxu0
  %v2532 = vadd.f32 %v2518, %v2531
  %v2533 = vpop.f32.mrf.mxu0
  %v2534 = vadd.f32 %v2520, %v2533
  %2535 = vdwg.mxu0
  %2536 = vmatpush.bf16.msra.mxu0 %v1790
  %2537 = vmatpush.bf16.msra.mxu0 %v1788
  %2538 = vmatpush.bf16.msra.mxu0 %v1786
  %2539 = vmatpush.bf16.msra.mxu0 %v1784
  %2540 = vmatpush.bf16.msra.mxu0 %v1782
  %2541 = vmatpush.bf16.msra.mxu0 %v1780
  %2542 = vmatpush.bf16.msra.mxu0 %v1778
  %2543 = vmatpush.bf16.msra.mxu0 %v1776
  %2544 = vmatmul.bf16.gmra.mxu0 %v516
  %v2545 = vpop.f32.mrf.mxu0
  %v2546 = vadd.f32 %v2532, %v2545
  %v2547 = vpop.f32.mrf.mxu0
  %v2548 = vadd.f32 %v2534, %v2547
  %2549 = vdwg.mxu0
  %2550 = vmatpush.bf16.msra.mxu0 %v1806
  %2551 = vmatpush.bf16.msra.mxu0 %v1804
  %2552 = vmatpush.bf16.msra.mxu0 %v1802
  %2553 = vmatpush.bf16.msra.mxu0 %v1800
  %2554 = vmatpush.bf16.msra.mxu0 %v1798
  %2555 = vmatpush.bf16.msra.mxu0 %v1796
  %2556 = vmatpush.bf16.msra.mxu0 %v1794
  %2557 = vmatpush.bf16.msra.mxu0 %v1792
  %2558 = vmatmul.bf16.gmra.mxu0 %v517
  %v2559 = vpop.f32.mrf.mxu0
  %v2560 = vadd.f32 %v2546, %v2559
  %v2561 = vpop.f32.mrf.mxu0
  %v2562 = vadd.f32 %v2548, %v2561
  %2563 = vdwg.mxu0
  %2564 = vmatpush.bf16.msra.mxu0 %v1822
  %2565 = vmatpush.bf16.msra.mxu0 %v1820
  %2566 = vmatpush.bf16.msra.mxu0 %v1818
  %2567 = vmatpush.bf16.msra.mxu0 %v1816
  %2568 = vmatpush.bf16.msra.mxu0 %v1814
  %2569 = vmatpush.bf16.msra.mxu0 %v1812
  %2570 = vmatpush.bf16.msra.mxu0 %v1810
  %2571 = vmatpush.bf16.msra.mxu0 %v1808
  %2572 = vmatmul.bf16.gmra.mxu0 %v518
  %v2573 = vpop.f32.mrf.mxu0
  %v2574 = vadd.f32 %v2560, %v2573
  %v2575 = vpop.f32.mrf.mxu0
  %v2576 = vadd.f32 %v2562, %v2575
  %2577 = vdwg.mxu0
  %2578 = vmatpush.bf16.msra.mxu0 %v1838
  %2579 = vmatpush.bf16.msra.mxu0 %v1836
  %2580 = vmatpush.bf16.msra.mxu0 %v1834
  %2581 = vmatpush.bf16.msra.mxu0 %v1832
  %2582 = vmatpush.bf16.msra.mxu0 %v1830
  %2583 = vmatpush.bf16.msra.mxu0 %v1828
  %2584 = vmatpush.bf16.msra.mxu0 %v1826
  %2585 = vmatpush.bf16.msra.mxu0 %v1824
  %2586 = vmatmul.bf16.gmra.mxu0 %v519
  %v2587 = vpop.f32.mrf.mxu0
  %v2588 = vadd.f32 %v2574, %v2587
  %v2589 = vpop.f32.mrf.mxu0
  %v2590 = vadd.f32 %v2576, %v2589
  %2591 = vdwg.mxu0
  %2592 = vmatpush.bf16.msra.mxu0 %v1854
  %2593 = vmatpush.bf16.msra.mxu0 %v1852
  %2594 = vmatpush.bf16.msra.mxu0 %v1850
  %2595 = vmatpush.bf16.msra.mxu0 %v1848
  %2596 = vmatpush.bf16.msra.mxu0 %v1846
  %2597 = vmatpush.bf16.msra.mxu0 %v1844
  %2598 = vmatpush.bf16.msra.mxu0 %v1842
  %2599 = vmatpush.bf16.msra.mxu0 %v1840
  %2600 = vmatmul.bf16.gmra.mxu0 %v520
  %v2601 = vpop.f32.mrf.mxu0
  %v2602 = vadd.f32 %v2588, %v2601
  %v2603 = vpop.f32.mrf.mxu0
  %v2604 = vadd.f32 %v2590, %v2603
  %2605 = vdwg.mxu0
  %2606 = vmatpush.bf16.msra.mxu0 %v1870
  %2607 = vmatpush.bf16.msra.mxu0 %v1868
  %2608 = vmatpush.bf16.msra.mxu0 %v1866
  %2609 = vmatpush.bf16.msra.mxu0 %v1864
  %2610 = vmatpush.bf16.msra.mxu0 %v1862
  %2611 = vmatpush.bf16.msra.mxu0 %v1860
  %2612 = vmatpush.bf16.msra.mxu0 %v1858
  %2613 = vmatpush.bf16.msra.mxu0 %v1856
  %2614 = vmatmul.bf16.gmra.mxu0 %v521
  %v2615 = vpop.f32.mrf.mxu0
  %v2616 = vadd.f32 %v2602, %v2615
  %v2617 = vpop.f32.mrf.mxu0
  %v2618 = vadd.f32 %v2604, %v2617
  %2619 = vdwg.mxu0
  %2620 = vmatpush.bf16.msra.mxu0 %v1886
  %2621 = vmatpush.bf16.msra.mxu0 %v1884
  %2622 = vmatpush.bf16.msra.mxu0 %v1882
  %2623 = vmatpush.bf16.msra.mxu0 %v1880
  %2624 = vmatpush.bf16.msra.mxu0 %v1878
  %2625 = vmatpush.bf16.msra.mxu0 %v1876
  %2626 = vmatpush.bf16.msra.mxu0 %v1874
  %2627 = vmatpush.bf16.msra.mxu0 %v1872
  %2628 = vmatmul.bf16.gmra.mxu0 %v522
  %v2629 = vpop.f32.mrf.mxu0
  %v2630 = vadd.f32 %v2616, %v2629
  %v2631 = vpop.f32.mrf.mxu0
  %v2632 = vadd.f32 %v2618, %v2631
  %2633 = vdwg.mxu0
  %2634 = vmatpush.bf16.msra.mxu0 %v1902
  %2635 = vmatpush.bf16.msra.mxu0 %v1900
  %2636 = vmatpush.bf16.msra.mxu0 %v1898
  %2637 = vmatpush.bf16.msra.mxu0 %v1896
  %2638 = vmatpush.bf16.msra.mxu0 %v1894
  %2639 = vmatpush.bf16.msra.mxu0 %v1892
  %2640 = vmatpush.bf16.msra.mxu0 %v1890
  %2641 = vmatpush.bf16.msra.mxu0 %v1888
  %2642 = vmatmul.bf16.gmra.mxu0 %v523
  %v2643 = vpop.f32.mrf.mxu0
  %v2644 = vadd.f32 %v2630, %v2643
  %v2645 = vpop.f32.mrf.mxu0
  %v2646 = vadd.f32 %v2632, %v2645
  %2647 = vdwg.mxu0
  %2648 = vmatpush.bf16.msra.mxu0 %v1918
  %2649 = vmatpush.bf16.msra.mxu0 %v1916
  %2650 = vmatpush.bf16.msra.mxu0 %v1914
  %2651 = vmatpush.bf16.msra.mxu0 %v1912
  %2652 = vmatpush.bf16.msra.mxu0 %v1910
  %2653 = vmatpush.bf16.msra.mxu0 %v1908
  %2654 = vmatpush.bf16.msra.mxu0 %v1906
  %2655 = vmatpush.bf16.msra.mxu0 %v1904
  %2656 = vmatmul.bf16.gmra.mxu0 %v524
  %v2657 = vpop.f32.mrf.mxu0
  %v2658 = vadd.f32 %v2644, %v2657
  %v2659 = vpop.f32.mrf.mxu0
  %v2660 = vadd.f32 %v2646, %v2659
  %2661 = vdwg.mxu0
  %2662 = vmatpush.bf16.msra.mxu0 %v1934
  %2663 = vmatpush.bf16.msra.mxu0 %v1932
  %2664 = vmatpush.bf16.msra.mxu0 %v1930
  %2665 = vmatpush.bf16.msra.mxu0 %v1928
  %2666 = vmatpush.bf16.msra.mxu0 %v1926
  %2667 = vmatpush.bf16.msra.mxu0 %v1924
  %2668 = vmatpush.bf16.msra.mxu0 %v1922
  %2669 = vmatpush.bf16.msra.mxu0 %v1920
  %2670 = vmatmul.bf16.gmra.mxu0 %v525
  %v2671 = vpop.f32.mrf.mxu0
  %v2672 = vadd.f32 %v2658, %v2671
  %v2673 = vpop.f32.mrf.mxu0
  %v2674 = vadd.f32 %v2660, %v2673
  %2675 = vdwg.mxu0
  %2676 = vmatpush.bf16.msra.mxu0 %v1950
  %2677 = vmatpush.bf16.msra.mxu0 %v1948
  %2678 = vmatpush.bf16.msra.mxu0 %v1946
  %2679 = vmatpush.bf16.msra.mxu0 %v1944
  %2680 = vmatpush.bf16.msra.mxu0 %v1942
  %2681 = vmatpush.bf16.msra.mxu0 %v1940
  %2682 = vmatpush.bf16.msra.mxu0 %v1938
  %2683 = vmatpush.bf16.msra.mxu0 %v1936
  %2684 = vmatmul.bf16.gmra.mxu0 %v526
  %v2685 = vpop.f32.mrf.mxu0
  %v2686 = vadd.f32 %v2672, %v2685
  %v2687 = vpop.f32.mrf.mxu0
  %v2688 = vadd.f32 %v2674, %v2687
  %2689 = vdwg.mxu0
  %2690 = vmatpush.bf16.msra.mxu0 %v1966
  %2691 = vmatpush.bf16.msra.mxu0 %v1964
  %2692 = vmatpush.bf16.msra.mxu0 %v1962
  %2693 = vmatpush.bf16.msra.mxu0 %v1960
  %2694 = vmatpush.bf16.msra.mxu0 %v1958
  %2695 = vmatpush.bf16.msra.mxu0 %v1956
  %2696 = vmatpush.bf16.msra.mxu0 %v1954
  %2697 = vmatpush.bf16.msra.mxu0 %v1952
  %2698 = vmatmul.bf16.gmra.mxu0 %v527
  %v2699 = vpop.f32.mrf.mxu0
  %v2700 = vadd.f32 %v2686, %v2699
  %v2701 = vpop.f32.mrf.mxu0
  %v2702 = vadd.f32 %v2688, %v2701
  %2703 = vdwg.mxu0
  %2704 = vmatpush.bf16.msra.mxu0 %v1982
  %2705 = vmatpush.bf16.msra.mxu0 %v1980
  %2706 = vmatpush.bf16.msra.mxu0 %v1978
  %2707 = vmatpush.bf16.msra.mxu0 %v1976
  %2708 = vmatpush.bf16.msra.mxu0 %v1974
  %2709 = vmatpush.bf16.msra.mxu0 %v1972
  %2710 = vmatpush.bf16.msra.mxu0 %v1970
  %2711 = vmatpush.bf16.msra.mxu0 %v1968
  %2712 = vmatmul.bf16.gmra.mxu0 %v528
  %v2713 = vpop.f32.mrf.mxu0
  %v2714 = vadd.f32 %v2700, %v2713
  %v2715 = vpop.f32.mrf.mxu0
  %v2716 = vadd.f32 %v2702, %v2715
  %2717 = vdwg.mxu0
  %2718 = vmatpush.bf16.msra.mxu0 %v1998
  %2719 = vmatpush.bf16.msra.mxu0 %v1996
  %2720 = vmatpush.bf16.msra.mxu0 %v1994
  %2721 = vmatpush.bf16.msra.mxu0 %v1992
  %2722 = vmatpush.bf16.msra.mxu0 %v1990
  %2723 = vmatpush.bf16.msra.mxu0 %v1988
  %2724 = vmatpush.bf16.msra.mxu0 %v1986
  %2725 = vmatpush.bf16.msra.mxu0 %v1984
  %2726 = vmatmul.bf16.gmra.mxu0 %v529
  %v2727 = vpop.f32.mrf.mxu0
  %v2728 = vadd.f32 %v2714, %v2727
  %v2729 = vpop.f32.mrf.mxu0
  %v2730 = vadd.f32 %v2716, %v2729
  %2731 = vdwg.mxu0
  %2732 = vmatpush.bf16.msra.mxu0 %v2014
  %2733 = vmatpush.bf16.msra.mxu0 %v2012
  %2734 = vmatpush.bf16.msra.mxu0 %v2010
  %2735 = vmatpush.bf16.msra.mxu0 %v2008
  %2736 = vmatpush.bf16.msra.mxu0 %v2006
  %2737 = vmatpush.bf16.msra.mxu0 %v2004
  %2738 = vmatpush.bf16.msra.mxu0 %v2002
  %2739 = vmatpush.bf16.msra.mxu0 %v2000
  %2740 = vmatmul.bf16.gmra.mxu0 %v530
  %v2741 = vpop.f32.mrf.mxu0
  %v2742 = vadd.f32 %v2728, %v2741
  %v2743 = vpop.f32.mrf.mxu0
  %v2744 = vadd.f32 %v2730, %v2743
  %2745 = vdwg.mxu0
  %2746 = vmatpush.bf16.msra.mxu0 %v2030
  %2747 = vmatpush.bf16.msra.mxu0 %v2028
  %2748 = vmatpush.bf16.msra.mxu0 %v2026
  %2749 = vmatpush.bf16.msra.mxu0 %v2024
  %2750 = vmatpush.bf16.msra.mxu0 %v2022
  %2751 = vmatpush.bf16.msra.mxu0 %v2020
  %2752 = vmatpush.bf16.msra.mxu0 %v2018
  %2753 = vmatpush.bf16.msra.mxu0 %v2016
  %2754 = vmatmul.bf16.gmra.mxu0 %v531
  %v2755 = vpop.f32.mrf.mxu0
  %v2756 = vadd.f32 %v2742, %v2755
  %v2757 = vpop.f32.mrf.mxu0
  %v2758 = vadd.f32 %v2744, %v2757
  %2759 = vdwg.mxu0
  %2760 = vmatpush.bf16.msra.mxu0 %v2046
  %2761 = vmatpush.bf16.msra.mxu0 %v2044
  %2762 = vmatpush.bf16.msra.mxu0 %v2042
  %2763 = vmatpush.bf16.msra.mxu0 %v2040
  %2764 = vmatpush.bf16.msra.mxu0 %v2038
  %2765 = vmatpush.bf16.msra.mxu0 %v2036
  %2766 = vmatpush.bf16.msra.mxu0 %v2034
  %2767 = vmatpush.bf16.msra.mxu0 %v2032
  %2768 = vmatmul.bf16.gmra.mxu0 %v532
  %v2769 = vpop.f32.mrf.mxu0
  %v2770 = vadd.f32 %v2756, %v2769
  %v2771 = vpop.f32.mrf.mxu0
  %v2772 = vadd.f32 %v2758, %v2771
  %2773 = vdwg.mxu0
  %2774 = vmatpush.bf16.msra.mxu0 %v2062
  %2775 = vmatpush.bf16.msra.mxu0 %v2060
  %2776 = vmatpush.bf16.msra.mxu0 %v2058
  %2777 = vmatpush.bf16.msra.mxu0 %v2056
  %2778 = vmatpush.bf16.msra.mxu0 %v2054
  %2779 = vmatpush.bf16.msra.mxu0 %v2052
  %2780 = vmatpush.bf16.msra.mxu0 %v2050
  %2781 = vmatpush.bf16.msra.mxu0 %v2048
  %2782 = vmatmul.bf16.gmra.mxu0 %v533
  %v2783 = vpop.f32.mrf.mxu0
  %v2784 = vadd.f32 %v2770, %v2783
  %v2785 = vpop.f32.mrf.mxu0
  %v2786 = vadd.f32 %v2772, %v2785
  %2787 = vdwg.mxu0
  %2788 = vmatpush.bf16.msra.mxu0 %v2078
  %2789 = vmatpush.bf16.msra.mxu0 %v2076
  %2790 = vmatpush.bf16.msra.mxu0 %v2074
  %2791 = vmatpush.bf16.msra.mxu0 %v2072
  %2792 = vmatpush.bf16.msra.mxu0 %v2070
  %2793 = vmatpush.bf16.msra.mxu0 %v2068
  %2794 = vmatpush.bf16.msra.mxu0 %v2066
  %2795 = vmatpush.bf16.msra.mxu0 %v2064
  %2796 = vmatmul.bf16.gmra.mxu0 %v534
  %v2797 = vpop.f32.mrf.mxu0
  %v2798 = vadd.f32 %v2784, %v2797
  %v2799 = vpop.f32.mrf.mxu0
  %v2800 = vadd.f32 %v2786, %v2799
  %2801 = vdwg.mxu0
  %2802 = vmatpush.bf16.msra.mxu0 %v2094
  %2803 = vmatpush.bf16.msra.mxu0 %v2092
  %2804 = vmatpush.bf16.msra.mxu0 %v2090
  %2805 = vmatpush.bf16.msra.mxu0 %v2088
  %2806 = vmatpush.bf16.msra.mxu0 %v2086
  %2807 = vmatpush.bf16.msra.mxu0 %v2084
  %2808 = vmatpush.bf16.msra.mxu0 %v2082
  %2809 = vmatpush.bf16.msra.mxu0 %v2080
  %2810 = vmatmul.bf16.gmra.mxu0 %v535
  %v2811 = vpop.f32.mrf.mxu0
  %v2812 = vadd.f32 %v2798, %v2811
  %v2813 = vpop.f32.mrf.mxu0
  %v2814 = vadd.f32 %v2800, %v2813
  %2815 = vdwg.mxu0
  %2816 = vmatpush.bf16.msra.mxu0 %v1727
  %2817 = vmatpush.bf16.msra.mxu0 %v1725
  %2818 = vmatpush.bf16.msra.mxu0 %v1723
  %2819 = vmatpush.bf16.msra.mxu0 %v1721
  %2820 = vmatpush.bf16.msra.mxu0 %v1719
  %2821 = vmatpush.bf16.msra.mxu0 %v1717
  %2822 = vmatpush.bf16.msra.mxu0 %v1715
  %2823 = vmatpush.bf16.msra.mxu0 %v1713
  %2824 = vmatmul.bf16.gmra.mxu0 %v512
  %v2825 = vpop.f32.mrf.mxu0
  %v2826 = vadd.f32 %v437, %v2825
  %v2827 = vpop.f32.mrf.mxu0
  %v2828 = vadd.f32 %v437, %v2827
  %2829 = vdwg.mxu0
  %2830 = vmatpush.bf16.msra.mxu0 %v1743
  %2831 = vmatpush.bf16.msra.mxu0 %v1741
  %2832 = vmatpush.bf16.msra.mxu0 %v1739
  %2833 = vmatpush.bf16.msra.mxu0 %v1737
  %2834 = vmatpush.bf16.msra.mxu0 %v1735
  %2835 = vmatpush.bf16.msra.mxu0 %v1733
  %2836 = vmatpush.bf16.msra.mxu0 %v1731
  %2837 = vmatpush.bf16.msra.mxu0 %v1729
  %2838 = vmatmul.bf16.gmra.mxu0 %v513
  %v2839 = vpop.f32.mrf.mxu0
  %v2840 = vadd.f32 %v2826, %v2839
  %v2841 = vpop.f32.mrf.mxu0
  %v2842 = vadd.f32 %v2828, %v2841
  %2843 = vdwg.mxu0
  %2844 = vmatpush.bf16.msra.mxu0 %v1759
  %2845 = vmatpush.bf16.msra.mxu0 %v1757
  %2846 = vmatpush.bf16.msra.mxu0 %v1755
  %2847 = vmatpush.bf16.msra.mxu0 %v1753
  %2848 = vmatpush.bf16.msra.mxu0 %v1751
  %2849 = vmatpush.bf16.msra.mxu0 %v1749
  %2850 = vmatpush.bf16.msra.mxu0 %v1747
  %2851 = vmatpush.bf16.msra.mxu0 %v1745
  %2852 = vmatmul.bf16.gmra.mxu0 %v514
  %v2853 = vpop.f32.mrf.mxu0
  %v2854 = vadd.f32 %v2840, %v2853
  %v2855 = vpop.f32.mrf.mxu0
  %v2856 = vadd.f32 %v2842, %v2855
  %2857 = vdwg.mxu0
  %2858 = vmatpush.bf16.msra.mxu0 %v1775
  %2859 = vmatpush.bf16.msra.mxu0 %v1773
  %2860 = vmatpush.bf16.msra.mxu0 %v1771
  %2861 = vmatpush.bf16.msra.mxu0 %v1769
  %2862 = vmatpush.bf16.msra.mxu0 %v1767
  %2863 = vmatpush.bf16.msra.mxu0 %v1765
  %2864 = vmatpush.bf16.msra.mxu0 %v1763
  %2865 = vmatpush.bf16.msra.mxu0 %v1761
  %2866 = vmatmul.bf16.gmra.mxu0 %v515
  %v2867 = vpop.f32.mrf.mxu0
  %v2868 = vadd.f32 %v2854, %v2867
  %v2869 = vpop.f32.mrf.mxu0
  %v2870 = vadd.f32 %v2856, %v2869
  %2871 = vdwg.mxu0
  %2872 = vmatpush.bf16.msra.mxu0 %v1791
  %2873 = vmatpush.bf16.msra.mxu0 %v1789
  %2874 = vmatpush.bf16.msra.mxu0 %v1787
  %2875 = vmatpush.bf16.msra.mxu0 %v1785
  %2876 = vmatpush.bf16.msra.mxu0 %v1783
  %2877 = vmatpush.bf16.msra.mxu0 %v1781
  %2878 = vmatpush.bf16.msra.mxu0 %v1779
  %2879 = vmatpush.bf16.msra.mxu0 %v1777
  %2880 = vmatmul.bf16.gmra.mxu0 %v516
  %v2881 = vpop.f32.mrf.mxu0
  %v2882 = vadd.f32 %v2868, %v2881
  %v2883 = vpop.f32.mrf.mxu0
  %v2884 = vadd.f32 %v2870, %v2883
  %2885 = vdwg.mxu0
  %2886 = vmatpush.bf16.msra.mxu0 %v1807
  %2887 = vmatpush.bf16.msra.mxu0 %v1805
  %2888 = vmatpush.bf16.msra.mxu0 %v1803
  %2889 = vmatpush.bf16.msra.mxu0 %v1801
  %2890 = vmatpush.bf16.msra.mxu0 %v1799
  %2891 = vmatpush.bf16.msra.mxu0 %v1797
  %2892 = vmatpush.bf16.msra.mxu0 %v1795
  %2893 = vmatpush.bf16.msra.mxu0 %v1793
  %2894 = vmatmul.bf16.gmra.mxu0 %v517
  %v2895 = vpop.f32.mrf.mxu0
  %v2896 = vadd.f32 %v2882, %v2895
  %v2897 = vpop.f32.mrf.mxu0
  %v2898 = vadd.f32 %v2884, %v2897
  %2899 = vdwg.mxu0
  %2900 = vmatpush.bf16.msra.mxu0 %v1823
  %2901 = vmatpush.bf16.msra.mxu0 %v1821
  %2902 = vmatpush.bf16.msra.mxu0 %v1819
  %2903 = vmatpush.bf16.msra.mxu0 %v1817
  %2904 = vmatpush.bf16.msra.mxu0 %v1815
  %2905 = vmatpush.bf16.msra.mxu0 %v1813
  %2906 = vmatpush.bf16.msra.mxu0 %v1811
  %2907 = vmatpush.bf16.msra.mxu0 %v1809
  %2908 = vmatmul.bf16.gmra.mxu0 %v518
  %v2909 = vpop.f32.mrf.mxu0
  %v2910 = vadd.f32 %v2896, %v2909
  %v2911 = vpop.f32.mrf.mxu0
  %v2912 = vadd.f32 %v2898, %v2911
  %2913 = vdwg.mxu0
  %2914 = vmatpush.bf16.msra.mxu0 %v1839
  %2915 = vmatpush.bf16.msra.mxu0 %v1837
  %2916 = vmatpush.bf16.msra.mxu0 %v1835
  %2917 = vmatpush.bf16.msra.mxu0 %v1833
  %2918 = vmatpush.bf16.msra.mxu0 %v1831
  %2919 = vmatpush.bf16.msra.mxu0 %v1829
  %2920 = vmatpush.bf16.msra.mxu0 %v1827
  %2921 = vmatpush.bf16.msra.mxu0 %v1825
  %2922 = vmatmul.bf16.gmra.mxu0 %v519
  %v2923 = vpop.f32.mrf.mxu0
  %v2924 = vadd.f32 %v2910, %v2923
  %v2925 = vpop.f32.mrf.mxu0
  %v2926 = vadd.f32 %v2912, %v2925
  %2927 = vdwg.mxu0
  %2928 = vmatpush.bf16.msra.mxu0 %v1855
  %2929 = vmatpush.bf16.msra.mxu0 %v1853
  %2930 = vmatpush.bf16.msra.mxu0 %v1851
  %2931 = vmatpush.bf16.msra.mxu0 %v1849
  %2932 = vmatpush.bf16.msra.mxu0 %v1847
  %2933 = vmatpush.bf16.msra.mxu0 %v1845
  %2934 = vmatpush.bf16.msra.mxu0 %v1843
  %2935 = vmatpush.bf16.msra.mxu0 %v1841
  %2936 = vmatmul.bf16.gmra.mxu0 %v520
  %v2937 = vpop.f32.mrf.mxu0
  %v2938 = vadd.f32 %v2924, %v2937
  %v2939 = vpop.f32.mrf.mxu0
  %v2940 = vadd.f32 %v2926, %v2939
  %2941 = vdwg.mxu0
  %2942 = vmatpush.bf16.msra.mxu0 %v1871
  %2943 = vmatpush.bf16.msra.mxu0 %v1869
  %2944 = vmatpush.bf16.msra.mxu0 %v1867
  %2945 = vmatpush.bf16.msra.mxu0 %v1865
  %2946 = vmatpush.bf16.msra.mxu0 %v1863
  %2947 = vmatpush.bf16.msra.mxu0 %v1861
  %2948 = vmatpush.bf16.msra.mxu0 %v1859
  %2949 = vmatpush.bf16.msra.mxu0 %v1857
  %2950 = vmatmul.bf16.gmra.mxu0 %v521
  %v2951 = vpop.f32.mrf.mxu0
  %v2952 = vadd.f32 %v2938, %v2951
  %v2953 = vpop.f32.mrf.mxu0
  %v2954 = vadd.f32 %v2940, %v2953
  %2955 = vdwg.mxu0
  %2956 = vmatpush.bf16.msra.mxu0 %v1887
  %2957 = vmatpush.bf16.msra.mxu0 %v1885
  %2958 = vmatpush.bf16.msra.mxu0 %v1883
  %2959 = vmatpush.bf16.msra.mxu0 %v1881
  %2960 = vmatpush.bf16.msra.mxu0 %v1879
  %2961 = vmatpush.bf16.msra.mxu0 %v1877
  %2962 = vmatpush.bf16.msra.mxu0 %v1875
  %2963 = vmatpush.bf16.msra.mxu0 %v1873
  %2964 = vmatmul.bf16.gmra.mxu0 %v522
  %v2965 = vpop.f32.mrf.mxu0
  %v2966 = vadd.f32 %v2952, %v2965
  %v2967 = vpop.f32.mrf.mxu0
  %v2968 = vadd.f32 %v2954, %v2967
  %2969 = vdwg.mxu0
  %2970 = vmatpush.bf16.msra.mxu0 %v1903
  %2971 = vmatpush.bf16.msra.mxu0 %v1901
  %2972 = vmatpush.bf16.msra.mxu0 %v1899
  %2973 = vmatpush.bf16.msra.mxu0 %v1897
  %2974 = vmatpush.bf16.msra.mxu0 %v1895
  %2975 = vmatpush.bf16.msra.mxu0 %v1893
  %2976 = vmatpush.bf16.msra.mxu0 %v1891
  %2977 = vmatpush.bf16.msra.mxu0 %v1889
  %2978 = vmatmul.bf16.gmra.mxu0 %v523
  %v2979 = vpop.f32.mrf.mxu0
  %v2980 = vadd.f32 %v2966, %v2979
  %v2981 = vpop.f32.mrf.mxu0
  %v2982 = vadd.f32 %v2968, %v2981
  %2983 = vdwg.mxu0
  %2984 = vmatpush.bf16.msra.mxu0 %v1919
  %2985 = vmatpush.bf16.msra.mxu0 %v1917
  %2986 = vmatpush.bf16.msra.mxu0 %v1915
  %2987 = vmatpush.bf16.msra.mxu0 %v1913
  %2988 = vmatpush.bf16.msra.mxu0 %v1911
  %2989 = vmatpush.bf16.msra.mxu0 %v1909
  %2990 = vmatpush.bf16.msra.mxu0 %v1907
  %2991 = vmatpush.bf16.msra.mxu0 %v1905
  %2992 = vmatmul.bf16.gmra.mxu0 %v524
  %v2993 = vpop.f32.mrf.mxu0
  %v2994 = vadd.f32 %v2980, %v2993
  %v2995 = vpop.f32.mrf.mxu0
  %v2996 = vadd.f32 %v2982, %v2995
  %2997 = vdwg.mxu0
  %2998 = vmatpush.bf16.msra.mxu0 %v1935
  %2999 = vmatpush.bf16.msra.mxu0 %v1933
  %3000 = vmatpush.bf16.msra.mxu0 %v1931
  %3001 = vmatpush.bf16.msra.mxu0 %v1929
  %3002 = vmatpush.bf16.msra.mxu0 %v1927
  %3003 = vmatpush.bf16.msra.mxu0 %v1925
  %3004 = vmatpush.bf16.msra.mxu0 %v1923
  %3005 = vmatpush.bf16.msra.mxu0 %v1921
  %3006 = vmatmul.bf16.gmra.mxu0 %v525
  %v3007 = vpop.f32.mrf.mxu0
  %v3008 = vadd.f32 %v2994, %v3007
  %v3009 = vpop.f32.mrf.mxu0
  %v3010 = vadd.f32 %v2996, %v3009
  %3011 = vdwg.mxu0
  %3012 = vmatpush.bf16.msra.mxu0 %v1951
  %3013 = vmatpush.bf16.msra.mxu0 %v1949
  %3014 = vmatpush.bf16.msra.mxu0 %v1947
  %3015 = vmatpush.bf16.msra.mxu0 %v1945
  %3016 = vmatpush.bf16.msra.mxu0 %v1943
  %3017 = vmatpush.bf16.msra.mxu0 %v1941
  %3018 = vmatpush.bf16.msra.mxu0 %v1939
  %3019 = vmatpush.bf16.msra.mxu0 %v1937
  %3020 = vmatmul.bf16.gmra.mxu0 %v526
  %v3021 = vpop.f32.mrf.mxu0
  %v3022 = vadd.f32 %v3008, %v3021
  %v3023 = vpop.f32.mrf.mxu0
  %v3024 = vadd.f32 %v3010, %v3023
  %3025 = vdwg.mxu0
  %3026 = vmatpush.bf16.msra.mxu0 %v1967
  %3027 = vmatpush.bf16.msra.mxu0 %v1965
  %3028 = vmatpush.bf16.msra.mxu0 %v1963
  %3029 = vmatpush.bf16.msra.mxu0 %v1961
  %3030 = vmatpush.bf16.msra.mxu0 %v1959
  %3031 = vmatpush.bf16.msra.mxu0 %v1957
  %3032 = vmatpush.bf16.msra.mxu0 %v1955
  %3033 = vmatpush.bf16.msra.mxu0 %v1953
  %3034 = vmatmul.bf16.gmra.mxu0 %v527
  %v3035 = vpop.f32.mrf.mxu0
  %v3036 = vadd.f32 %v3022, %v3035
  %v3037 = vpop.f32.mrf.mxu0
  %v3038 = vadd.f32 %v3024, %v3037
  %3039 = vdwg.mxu0
  %3040 = vmatpush.bf16.msra.mxu0 %v1983
  %3041 = vmatpush.bf16.msra.mxu0 %v1981
  %3042 = vmatpush.bf16.msra.mxu0 %v1979
  %3043 = vmatpush.bf16.msra.mxu0 %v1977
  %3044 = vmatpush.bf16.msra.mxu0 %v1975
  %3045 = vmatpush.bf16.msra.mxu0 %v1973
  %3046 = vmatpush.bf16.msra.mxu0 %v1971
  %3047 = vmatpush.bf16.msra.mxu0 %v1969
  %3048 = vmatmul.bf16.gmra.mxu0 %v528
  %v3049 = vpop.f32.mrf.mxu0
  %v3050 = vadd.f32 %v3036, %v3049
  %v3051 = vpop.f32.mrf.mxu0
  %v3052 = vadd.f32 %v3038, %v3051
  %3053 = vdwg.mxu0
  %3054 = vmatpush.bf16.msra.mxu0 %v1999
  %3055 = vmatpush.bf16.msra.mxu0 %v1997
  %3056 = vmatpush.bf16.msra.mxu0 %v1995
  %3057 = vmatpush.bf16.msra.mxu0 %v1993
  %3058 = vmatpush.bf16.msra.mxu0 %v1991
  %3059 = vmatpush.bf16.msra.mxu0 %v1989
  %3060 = vmatpush.bf16.msra.mxu0 %v1987
  %3061 = vmatpush.bf16.msra.mxu0 %v1985
  %3062 = vmatmul.bf16.gmra.mxu0 %v529
  %v3063 = vpop.f32.mrf.mxu0
  %v3064 = vadd.f32 %v3050, %v3063
  %v3065 = vpop.f32.mrf.mxu0
  %v3066 = vadd.f32 %v3052, %v3065
  %3067 = vdwg.mxu0
  %3068 = vmatpush.bf16.msra.mxu0 %v2015
  %3069 = vmatpush.bf16.msra.mxu0 %v2013
  %3070 = vmatpush.bf16.msra.mxu0 %v2011
  %3071 = vmatpush.bf16.msra.mxu0 %v2009
  %3072 = vmatpush.bf16.msra.mxu0 %v2007
  %3073 = vmatpush.bf16.msra.mxu0 %v2005
  %3074 = vmatpush.bf16.msra.mxu0 %v2003
  %3075 = vmatpush.bf16.msra.mxu0 %v2001
  %3076 = vmatmul.bf16.gmra.mxu0 %v530
  %v3077 = vpop.f32.mrf.mxu0
  %v3078 = vadd.f32 %v3064, %v3077
  %v3079 = vpop.f32.mrf.mxu0
  %v3080 = vadd.f32 %v3066, %v3079
  %3081 = vdwg.mxu0
  %3082 = vmatpush.bf16.msra.mxu0 %v2031
  %3083 = vmatpush.bf16.msra.mxu0 %v2029
  %3084 = vmatpush.bf16.msra.mxu0 %v2027
  %3085 = vmatpush.bf16.msra.mxu0 %v2025
  %3086 = vmatpush.bf16.msra.mxu0 %v2023
  %3087 = vmatpush.bf16.msra.mxu0 %v2021
  %3088 = vmatpush.bf16.msra.mxu0 %v2019
  %3089 = vmatpush.bf16.msra.mxu0 %v2017
  %3090 = vmatmul.bf16.gmra.mxu0 %v531
  %v3091 = vpop.f32.mrf.mxu0
  %v3092 = vadd.f32 %v3078, %v3091
  %v3093 = vpop.f32.mrf.mxu0
  %v3094 = vadd.f32 %v3080, %v3093
  %3095 = vdwg.mxu0
  %3096 = vmatpush.bf16.msra.mxu0 %v2047
  %3097 = vmatpush.bf16.msra.mxu0 %v2045
  %3098 = vmatpush.bf16.msra.mxu0 %v2043
  %3099 = vmatpush.bf16.msra.mxu0 %v2041
  %3100 = vmatpush.bf16.msra.mxu0 %v2039
  %3101 = vmatpush.bf16.msra.mxu0 %v2037
  %3102 = vmatpush.bf16.msra.mxu0 %v2035
  %3103 = vmatpush.bf16.msra.mxu0 %v2033
  %3104 = vmatmul.bf16.gmra.mxu0 %v532
  %v3105 = vpop.f32.mrf.mxu0
  %v3106 = vadd.f32 %v3092, %v3105
  %v3107 = vpop.f32.mrf.mxu0
  %v3108 = vadd.f32 %v3094, %v3107
  %3109 = vdwg.mxu0
  %3110 = vmatpush.bf16.msra.mxu0 %v2063
  %3111 = vmatpush.bf16.msra.mxu0 %v2061
  %3112 = vmatpush.bf16.msra.mxu0 %v2059
  %3113 = vmatpush.bf16.msra.mxu0 %v2057
  %3114 = vmatpush.bf16.msra.mxu0 %v2055
  %3115 = vmatpush.bf16.msra.mxu0 %v2053
  %3116 = vmatpush.bf16.msra.mxu0 %v2051
  %3117 = vmatpush.bf16.msra.mxu0 %v2049
  %3118 = vmatmul.bf16.gmra.mxu0 %v533
  %v3119 = vpop.f32.mrf.mxu0
  %v3120 = vadd.f32 %v3106, %v3119
  %v3121 = vpop.f32.mrf.mxu0
  %v3122 = vadd.f32 %v3108, %v3121
  %3123 = vdwg.mxu0
  %3124 = vmatpush.bf16.msra.mxu0 %v2079
  %3125 = vmatpush.bf16.msra.mxu0 %v2077
  %3126 = vmatpush.bf16.msra.mxu0 %v2075
  %3127 = vmatpush.bf16.msra.mxu0 %v2073
  %3128 = vmatpush.bf16.msra.mxu0 %v2071
  %3129 = vmatpush.bf16.msra.mxu0 %v2069
  %3130 = vmatpush.bf16.msra.mxu0 %v2067
  %3131 = vmatpush.bf16.msra.mxu0 %v2065
  %3132 = vmatmul.bf16.gmra.mxu0 %v534
  %v3133 = vpop.f32.mrf.mxu0
  %v3134 = vadd.f32 %v3120, %v3133
  %v3135 = vpop.f32.mrf.mxu0
  %v3136 = vadd.f32 %v3122, %v3135
  %3137 = vdwg.mxu0
  %3138 = vmatpush.bf16.msra.mxu0 %v2095
  %3139 = vmatpush.bf16.msra.mxu0 %v2093
  %3140 = vmatpush.bf16.msra.mxu0 %v2091
  %3141 = vmatpush.bf16.msra.mxu0 %v2089
  %3142 = vmatpush.bf16.msra.mxu0 %v2087
  %3143 = vmatpush.bf16.msra.mxu0 %v2085
  %3144 = vmatpush.bf16.msra.mxu0 %v2083
  %3145 = vmatpush.bf16.msra.mxu0 %v2081
  %3146 = vmatmul.bf16.gmra.mxu0 %v535
  %v3147 = vpop.f32.mrf.mxu0
  %v3148 = vadd.f32 %v3134, %v3147
  %v3149 = vpop.f32.mrf.mxu0
  %v3150 = vadd.f32 %v3136, %v3149
  %3151 = vdwg.mxu0
  %v3152 = vmax.f32 %v2812, 0.0
  %v3153 = vmax.f32 %v3148, 0.0
  %v3154 = vmax.f32 %v2814, 0.0
  %v3155 = vmax.f32 %v3150, 0.0
  %v3156 = vpack.c.bf16 %v3154, %v3152
  %v3157 = vpack.c.bf16 %v3155, %v3153
  %v3158 = vld [vmem:[%s3] sm:$0xf]
  %v3159 = vld [vmem:[%s3 + $0x4] sm:$0xf]
  %v3160 = vld [vmem:[%s3 + $0x8] sm:$0xf]
  %v3161 = vld [vmem:[%s3 + $0xc] sm:$0xf]
  %v3162 = vld [vmem:[%s3 + $0x10] sm:$0xf]
  %v3163 = vld [vmem:[%s3 + $0x14] sm:$0xf]
  %v3164 = vld [vmem:[%s3 + $0x18] sm:$0xf]
  %v3165 = vld [vmem:[%s3 + $0x1c] sm:$0xf]
  %v3166 = vld [vmem:[%s3 + $0x20] sm:$0xf]
  %v3167 = vld [vmem:[%s3 + $0x24] sm:$0xf]
  %v3168 = vld [vmem:[%s3 + $0x28] sm:$0xf]
  %v3169 = vld [vmem:[%s3 + $0x2c] sm:$0xf]
  %v3170 = vld [vmem:[%s3 + $0x30] sm:$0xf]
  %v3171 = vld [vmem:[%s3 + $0x34] sm:$0xf]
  %v3172 = vld [vmem:[%s3 + $0x38] sm:$0xf]
  %v3173 = vld [vmem:[%s3 + $0x3c] sm:$0xf]
  %v3174 = vld [vmem:[%s3 + $0x40] sm:$0xf]
  %v3175 = vld [vmem:[%s3 + $0x44] sm:$0xf]
  %v3176 = vld [vmem:[%s3 + $0x48] sm:$0xf]
  %v3177 = vld [vmem:[%s3 + $0x4c] sm:$0xf]
  %v3178 = vld [vmem:[%s3 + $0x50] sm:$0xf]
  %v3179 = vld [vmem:[%s3 + $0x54] sm:$0xf]
  %v3180 = vld [vmem:[%s3 + $0x58] sm:$0xf]
  %v3181 = vld [vmem:[%s3 + $0x5c] sm:$0xf]
  %v3182 = vld [vmem:[%s3 + $0x60] sm:$0xf]
  %v3183 = vld [vmem:[%s3 + $0x64] sm:$0xf]
  %v3184 = vld [vmem:[%s3 + $0x68] sm:$0xf]
  %v3185 = vld [vmem:[%s3 + $0x6c] sm:$0xf]
  %v3186 = vld [vmem:[%s3 + $0x70] sm:$0xf]
  %v3187 = vld [vmem:[%s3 + $0x74] sm:$0xf]
  %v3188 = vld [vmem:[%s3 + $0x78] sm:$0xf]
  %v3189 = vld [vmem:[%s3 + $0x7c] sm:$0xf]
  %v3190 = vld [vmem:[%s4] sm:$0x1]
  %v3192 = vperm.slane %v3190, 0
  %v3226 = vunpack.c.l.b16 %v3158
  %v3227 = vunpack.c.l.b16 %v3159
  %v3228 = vunpack.c.l.b16 %v3160
  %v3229 = vunpack.c.l.b16 %v3161
  %v3230 = vunpack.c.l.b16 %v3162
  %v3231 = vunpack.c.l.b16 %v3163
  %v3232 = vunpack.c.l.b16 %v3164
  %v3233 = vunpack.c.l.b16 %v3165
  %v3234 = vunpack.c.l.b16 %v3166
  %v3235 = vunpack.c.l.b16 %v3167
  %v3236 = vunpack.c.l.b16 %v3168
  %v3237 = vunpack.c.l.b16 %v3169
  %v3238 = vunpack.c.l.b16 %v3170
  %v3239 = vunpack.c.l.b16 %v3171
  %v3240 = vunpack.c.l.b16 %v3172
  %v3241 = vunpack.c.l.b16 %v3173
  %v3242 = vunpack.c.l.b16 %v3174
  %v3243 = vunpack.c.l.b16 %v3175
  %v3244 = vunpack.c.l.b16 %v3176
  %v3245 = vunpack.c.l.b16 %v3177
  %v3246 = vunpack.c.l.b16 %v3178
  %v3247 = vunpack.c.l.b16 %v3179
  %v3248 = vunpack.c.l.b16 %v3180
  %v3249 = vunpack.c.l.b16 %v3181
  %v3250 = vunpack.c.l.b16 %v3182
  %v3251 = vunpack.c.l.b16 %v3183
  %v3252 = vunpack.c.l.b16 %v3184
  %v3253 = vunpack.c.l.b16 %v3185
  %v3254 = vunpack.c.l.b16 %v3186
  %v3255 = vunpack.c.l.b16 %v3187
  %v3256 = vunpack.c.l.b16 %v3188
  %v3257 = vunpack.c.l.b16 %v3189
  %v3258 = vpack.c.b16 %v3227, %v3226
  %v3259 = vpack.c.b16 %v3229, %v3228
  %v3260 = vpack.c.b16 %v3231, %v3230
  %v3261 = vpack.c.b16 %v3233, %v3232
  %v3262 = vpack.c.b16 %v3235, %v3234
  %v3263 = vpack.c.b16 %v3237, %v3236
  %v3264 = vpack.c.b16 %v3239, %v3238
  %v3265 = vpack.c.b16 %v3241, %v3240
  %v3266 = vpack.c.b16 %v3243, %v3242
  %v3267 = vpack.c.b16 %v3245, %v3244
  %v3268 = vpack.c.b16 %v3247, %v3246
  %v3269 = vpack.c.b16 %v3249, %v3248
  %v3270 = vpack.c.b16 %v3251, %v3250
  %v3271 = vpack.c.b16 %v3253, %v3252
  %v3272 = vpack.c.b16 %v3255, %v3254
  %v3273 = vpack.c.b16 %v3257, %v3256
  %3290 = vmatpush.bf16.msra.mxu0 %v3265
  %3291 = vmatpush.bf16.msra.mxu0 %v3264
  %3292 = vmatpush.bf16.msra.mxu0 %v3263
  %3293 = vmatpush.bf16.msra.mxu0 %v3262
  %3294 = vmatpush.bf16.msra.mxu0 %v3261
  %3295 = vmatpush.bf16.msra.mxu0 %v3260
  %3296 = vmatpush.bf16.msra.mxu0 %v3259
  %3297 = vmatpush.bf16.msra.mxu0 %v3258
  %3298 = vmatmul.bf16.gmra.mxu0 %v3156
  %v3299 = vpop.f32.mrf.mxu0
  %v3300 = vadd.f32 %v3192, %v3299
  %v3301 = vpop.f32.mrf.mxu0
  %v3302 = vadd.f32 %v3192, %v3301
  %3303 = vdwg.mxu0
  %3304 = vmatpush.bf16.msra.mxu0 %v3273
  %3305 = vmatpush.bf16.msra.mxu0 %v3272
  %3306 = vmatpush.bf16.msra.mxu0 %v3271
  %3307 = vmatpush.bf16.msra.mxu0 %v3270
  %3308 = vmatpush.bf16.msra.mxu0 %v3269
  %3309 = vmatpush.bf16.msra.mxu0 %v3268
  %3310 = vmatpush.bf16.msra.mxu0 %v3267
  %3311 = vmatpush.bf16.msra.mxu0 %v3266
  %3312 = vmatmul.bf16.gmra.mxu0 %v3157
  %v3313 = vpop.f32.mrf.mxu0
  %v3314 = vadd.f32 %v3300, %v3313
  %v3315 = vpop.f32.mrf.mxu0
  %v3316 = vadd.f32 %v3302, %v3315
  %3317 = vdwg.mxu0
  %v3318 = vmax.f32 %v3314, 0.0
  %v3319 = vmax.f32 %v3316, 0.0
  %v3320 = vpack.c.bf16 %v3319, %v3318
  %v3321 = vld [vmem:[%s5] sm:$0xf]
  %v3322 = vld [vmem:[%s5 + $0x4] sm:$0xf]
  %v3323 = vld [vmem:[%s5 + $0x8] sm:$0xf]
  %v3324 = vld [vmem:[%s5 + $0xc] sm:$0xf]
  %v3325 = vld [vmem:[%s5 + $0x10] sm:$0xf]
  %v3326 = vld [vmem:[%s5 + $0x14] sm:$0xf]
  %v3327 = vld [vmem:[%s5 + $0x18] sm:$0xf]
  %v3328 = vld [vmem:[%s5 + $0x1c] sm:$0xf]
  %v3329 = vld [vmem:[%s5 + $0x20] sm:$0xf]
  %v3330 = vld [vmem:[%s5 + $0x24] sm:$0xf]
  %v3331 = vld [vmem:[%s5 + $0x28] sm:$0xf]
  %v3332 = vld [vmem:[%s5 + $0x2c] sm:$0xf]
  %v3333 = vld [vmem:[%s5 + $0x30] sm:$0xf]
  %v3334 = vld [vmem:[%s5 + $0x34] sm:$0xf]
  %v3335 = vld [vmem:[%s5 + $0x38] sm:$0xf]
  %v3336 = vld [vmem:[%s5 + $0x3c] sm:$0xf]
  %v3337 = vld [vmem:[%s6] sm:$0x1]
  %v3339 = vperm.slane %v3337, 0
  %v3357 = vunpack.c.l.b16 %v3321
  %v3358 = vunpack.c.l.b16 %v3322
  %v3359 = vunpack.c.l.b16 %v3323
  %v3360 = vunpack.c.l.b16 %v3324
  %v3361 = vunpack.c.l.b16 %v3325
  %v3362 = vunpack.c.l.b16 %v3326
  %v3363 = vunpack.c.l.b16 %v3327
  %v3364 = vunpack.c.l.b16 %v3328
  %v3365 = vunpack.c.l.b16 %v3329
  %v3366 = vunpack.c.l.b16 %v3330
  %v3367 = vunpack.c.l.b16 %v3331
  %v3368 = vunpack.c.l.b16 %v3332
  %v3369 = vunpack.c.l.b16 %v3333
  %v3370 = vunpack.c.l.b16 %v3334
  %v3371 = vunpack.c.l.b16 %v3335
  %v3372 = vunpack.c.l.b16 %v3336
  %v3373 = vpack.c.b16 %v3358, %v3357
  %v3374 = vpack.c.b16 %v3360, %v3359
  %v3375 = vpack.c.b16 %v3362, %v3361
  %v3376 = vpack.c.b16 %v3364, %v3363
  %v3377 = vpack.c.b16 %v3366, %v3365
  %v3378 = vpack.c.b16 %v3368, %v3367
  %v3379 = vpack.c.b16 %v3370, %v3369
  %v3380 = vpack.c.b16 %v3372, %v3371
  %3389 = vmatpush.bf16.msra.mxu0 %v3380
  %3390 = vmatpush.bf16.msra.mxu0 %v3379
  %3391 = vmatpush.bf16.msra.mxu0 %v3378
  %3392 = vmatpush.bf16.msra.mxu0 %v3377
  %3393 = vmatpush.bf16.msra.mxu0 %v3376
  %3394 = vmatpush.bf16.msra.mxu0 %v3375
  %3395 = vmatpush.bf16.msra.mxu0 %v3374
  %3396 = vmatpush.bf16.msra.mxu0 %v3373
  %3397 = vmatmul.bf16.gmra.mxu0 %v3320
  %v3398 = vpop.f32.mrf.mxu0
  %v3399 = vadd.f32 %v3339, %v3398
  %v3400 = vpop.f32.mrf.mxu0
  %v3401 = vadd.f32 %v3339, %v3400
  %3402 = vdwg.mxu0
  %v3403 = vpack.c.bf16 %v3399, %v3399
  %v3404 = vpack.c.bf16 %v3401, %v3401
  %3405 = vst [vmem:[%s7] sm:$0xf] %v3403
  %3406 = vst [vmem:[%s7 + $0x4] sm:$0xf] %v3404
  // Predicated region
  $region30: #{mlp_net_forward.1} parent=0 // pred_check
    _
  $region31: #{mlp_net_forward.1} parent=0 // pred_check_branch
    %3408 = sbr.rel (0) target = $region33
  $region32: #{mlp_net_forward.1} parent=0 // pred_region
    _
  $region33: #{mlp_net_forward.1} parent=0 // pred_fallthru
    _
  // Predicated region
  $region34: #{mlp_net_forward.1} parent=0 // pred_check
    _
  $region35: #{mlp_net_forward.1} parent=0 // pred_check_branch
    %3410 = sbr.rel (0) target = $region37
  $region36: #{mlp_net_forward.1} parent=0 // pred_region
    _
  $region37: #{mlp_net_forward.1} parent=0 // pred_fallthru
    _

</llo_original>
